<compile_context>
chip_gen: v7x
topology: tpu7x:2x2x1
jax: 0.10.0
libtpu: 0.0.40
codegen_flags: <defaults>
</compile_context>

<pallas_src>
import jax
import jax.numpy as jnp
from jax import lax
from jax.experimental import pallas as pl
from jax.experimental.pallas import tpu as pltpu

CIN = 64
COUT = 64
GROUPS = 4
KH = KW = 3
DIL = 2
PAD = 1


def _conv_kernel(x_ref, w_ref, b_ref, o_ref, xpad_ref):
    """Grouped dilated 3x3 conv via 9 per-tap MXU dots accumulated in f32.

    x_ref:    (nb, H, W, CIN)        unpadded NHWC input block
    w_ref:    (KH*KW, CIN, COUT)     block-diagonal grouped weights, tap-major
    b_ref:    (1, COUT)
    o_ref:    (nb, 1, COUT*Ho*Wo)    channel-major (NCHW flatten order) output
    xpad_ref: (nb, Hp, Wp, CIN)      VMEM scratch holding the zero-padded input
    """
    nb, h, w, cin = x_ref.shape
    cout = b_ref.shape[1]
    hp = h + 2 * PAD
    wp = w + 2 * PAD
    ho = hp - DIL * (KH - 1)
    wo = wp - DIL * (KW - 1)
    hw = ho * wo
    m = nb * hw

    # Zero-pad inside the kernel: no padded-tensor HBM round trip in the wrapper.
    xpad_ref[...] = jnp.zeros_like(xpad_ref)
    xpad_ref[:, PAD:PAD + h, PAD:PAD + w, :] = x_ref[...]
    xp = xpad_ref[...]

    # Per-tap K=64 dots accumulated in f32.  This never materializes the
    # (m, 9*CIN) im2col patches array, so nothing spills out of the vreg file
    # and there are no non-128-aligned lane concatenations.
    acc = jnp.zeros((m, cout), jnp.float32)
    for t in range(KH * KW):                                   # static unroll
        ky, kx = divmod(t, KW)
        win = xp[:, ky * DIL:ky * DIL + ho, kx * DIL:kx * DIL + wo, :]
        acc = acc + jnp.dot(win.reshape(m, cin), w_ref[t],
                            preferred_element_type=jnp.float32)
    acc = acc + b_ref[...]                                     # broadcast (1, COUT)

    # v2 = sigmoid(v1); v3 = v1 * v2 in the reference module are dead code
    # (only v1 is returned), so they are intentionally not materialized.

    # One transpose to channel-major per batch element, then a lane-dense
    # (last dim = COUT*hw = multiple of 128) unmasked store.
    out = jnp.transpose(acc.reshape(nb, hw, cout), (0, 2, 1))  # (nb, cout, hw)
    o_ref[...] = out.reshape(nb, 1, cout * hw).astype(o_ref.dtype)


def grouped_dilated_conv_pallas(x_nchw, weight, bias):
    """x_nchw: (N, 64, H, W); weight: (64, 16, 3, 3) OIHW; bias: (64,)."""
    n, c, h, w = x_nchw.shape
    assert c == CIN
    hp, wp = h + 2 * PAD, w + 2 * PAD
    ho = hp - DIL * (KH - 1)            # = h - 2
    wo = wp - DIL * (KW - 1)            # = w - 2
    hw = ho * wo

    # Only the NCHW -> NHWC relayout stays in the wrapper (pad is in-kernel).
    # TODO(synk): keep the surrounding model NHWC end-to-end to drop this pass.
    x_nhwc = jnp.transpose(x_nchw, (0, 2, 3, 1)).astype(jnp.float32)

    # Block-diagonal grouped weights, tap-major: (KH*KW, CIN, COUT).  Kept fused
    # (K spans all input channels) — per-group N=16 matmuls would waste 7/8 of
    # the MXU lane width for no benefit.
    cpg_in = CIN // GROUPS
    cpg_out = COUT // GROUPS
    w_full = jnp.zeros((KH, KW, CIN, COUT), jnp.float32)
    for g in range(GROUPS):
        # PyTorch block (cpg_out, cpg_in, 3, 3) -> (3, 3, cpg_in, cpg_out)
        blk = jnp.transpose(weight[g * cpg_out:(g + 1) * cpg_out], (2, 3, 1, 0))
        w_full = w_full.at[:, :,
                           g * cpg_in:(g + 1) * cpg_in,
                           g * cpg_out:(g + 1) * cpg_out].set(blk)
    w_taps = w_full.reshape(KH * KW, CIN, COUT)
    b2 = bias.reshape(1, COUT).astype(jnp.float32)

    # nb = batch elements per grid step.  Keep >= 2 grid steps so the 'parallel'
    # axis can shard across both TensorCores on v7x (for N=2 this gives nb=1,
    # grid=(2,)); for larger batches raise nb (up to 8) to amortize the fixed
    # per-step overhead.  VMEM use is well under limits on v5e/v6e/v7x.
    nb = 1
    for cand in (8, 4, 2):
        if n % cand == 0 and n // cand >= 2:
            nb = cand
            break
    grid = (n // nb,)

    out = pl.pallas_call(
        _conv_kernel,
        out_shape=jax.ShapeDtypeStruct((n, 1, COUT * hw), jnp.float32),
        grid_spec=pltpu.PrefetchScalarGridSpec(
            num_scalar_prefetch=0,
            grid=grid,
            in_specs=[
                pl.BlockSpec((nb, h, w, CIN), lambda i: (i, 0, 0, 0)),
                pl.BlockSpec((KH * KW, CIN, COUT), lambda i: (0, 0, 0)),
                pl.BlockSpec((1, COUT), lambda i: (0, 0)),
            ],
            out_specs=pl.BlockSpec((nb, 1, COUT * hw), lambda i: (i, 0, 0)),
            scratch_shapes=[pltpu.VMEM((nb, hp, wp, CIN), jnp.float32)],
        ),
        compiler_params=pltpu.CompilerParams(
            dimension_semantics=("parallel",)),
    )(x_nhwc, w_taps, b2)

    # Kernel output is already in NCHW flatten order; this is a pure view.
    return out.reshape(-1, CIN * GROUPS, 1)    # (-1, 256, 1)


def reference_forward(x_nchw, weight, bias):
    out = lax.conv_general_dilated(
        x_nchw, weight,
        window_strides=(1, 1),
        padding=((PAD, PAD), (PAD, PAD)),
        rhs_dilation=(DIL, DIL),
        dimension_numbers=("NCHW", "OIHW", "NCHW"),
        feature_group_count=GROUPS,
    ) + bias.reshape(1, COUT, 1, 1)
    return out.reshape(-1, CIN * GROUPS, 1)


if __name__ == "__main__":
    key = jax.random.PRNGKey(0)
    kx, kw, kb = jax.random.split(key, 3)

    # (N, 64, H, W) with H=W=10 so the flattened conv output (2*64*8*8 = 8192)
    # is divisible by 256, as the .view(-1, 256, 1) requires.
    x = jax.random.normal(kx, (2, 64, 10, 10), jnp.float32)

    # Deterministic params (PyTorch Conv2d weight shape: (64, 16, 3, 3)).
    weight = jax.random.normal(kw, (COUT, CIN // GROUPS, KH, KW), jnp.float32) * 0.1
    bias = jax.random.normal(kb, (COUT,), jnp.float32) * 0.1

    v1 = grouped_dilated_conv_pallas(x, weight, bias)
    v1 = jax.block_until_ready(v1)

    ref = reference_forward(x, weight, bias)
    assert v1.shape == ref.shape == (32, 256, 1)
    assert jnp.allclose(v1, ref, rtol=1e-4, atol=1e-4)

    print("KERNEL_OK")
</pallas_src>

<mosaic_0001>
module attributes {stable_mosaic.version = 11 : i64} {
  func.func @_conv_kernel(%arg0: i32, %arg1: memref<1x10x10x64xf32, #tpu.memory_space<vmem>>, %arg2: memref<9x64x64xf32, #tpu.memory_space<vmem>>, %arg3: memref<1x64xf32, #tpu.memory_space<vmem>>, %arg4: memref<1x1x4096xf32, #tpu.memory_space<vmem>>, %arg5: memref<1x12x12x64xf32, #tpu.memory_space<vmem>>) attributes {dimension_semantics = [#tpu.dimension_semantics<parallel>], iteration_bounds = array<i64: 2>, scalar_prefetch = 0 : i64, scratch_operands = 1 : i64, tpu.core_type = #tpu.core_type<tc>, window_params = [{transform_indices = @transform_0, window_bounds = array<i64: 1, 10, 10, 64>}, {pipeline_mode = #tpu.pipeline_mode<synchronous>, transform_indices = @transform_1, window_bounds = array<i64: 9, 64, 64>}, {pipeline_mode = #tpu.pipeline_mode<synchronous>, transform_indices = @transform_2, window_bounds = array<i64: 1, 64>}, {transform_indices = @transform_3, window_bounds = array<i64: 1, 1, 4096>}]} {
    %cst = arith.constant 0.000000e+00 : f32
    %0 = vector.broadcast %cst : f32 to vector<1x12x12x64xf32>
    %c0 = arith.constant 0 : index
    %c0_0 = arith.constant 0 : index
    %c0_1 = arith.constant 0 : index
    %c0_2 = arith.constant 0 : index
    %1 = vector.load %arg5[%c0, %c0_0, %c0_1, %c0_2] : memref<1x12x12x64xf32, #tpu.memory_space<vmem>>, vector<1x12x12x64xf32>
    tpu.vector_store %arg5[%c0, %c0_0, %c0_1, %c0_2], %0 {strides = array<i32>} : memref<1x12x12x64xf32, #tpu.memory_space<vmem>>, vector<1x12x12x64xf32>,
    %c0_3 = arith.constant 0 : index
    %c0_4 = arith.constant 0 : index
    %c0_5 = arith.constant 0 : index
    %c0_6 = arith.constant 0 : index
    %2 = vector.load %arg1[%c0_3, %c0_4, %c0_5, %c0_6] : memref<1x10x10x64xf32, #tpu.memory_space<vmem>>, vector<1x10x10x64xf32>
    %c0_7 = arith.constant 0 : index
    %c1 = arith.constant 1 : index
    %c1_8 = arith.constant 1 : index
    %c0_9 = arith.constant 0 : index
    %3 = vector.load %arg5[%c0_7, %c1, %c1_8, %c0_9] : memref<1x12x12x64xf32, #tpu.memory_space<vmem>>, vector<1x10x10x64xf32>
    tpu.vector_store %arg5[%c0_7, %c1, %c1_8, %c0_9], %2 {strides = array<i32>} : memref<1x12x12x64xf32, #tpu.memory_space<vmem>>, vector<1x10x10x64xf32>,
    %c0_10 = arith.constant 0 : index
    %c0_11 = arith.constant 0 : index
    %c0_12 = arith.constant 0 : index
    %c0_13 = arith.constant 0 : index
    %4 = vector.load %arg5[%c0_10, %c0_11, %c0_12, %c0_13] : memref<1x12x12x64xf32, #tpu.memory_space<vmem>>, vector<1x12x12x64xf32>
    %cst_14 = arith.constant 0.000000e+00 : f32
    %5 = vector.broadcast %cst_14 : f32 to vector<64x64xf32>
    %6 = vector.extract_strided_slice %4 {offsets = [0, 0, 0, 0], sizes = [1, 8, 8, 64], strides = [1, 1, 1, 1]} : vector<1x12x12x64xf32> to vector<1x8x8x64xf32>
    %7 = vector.shape_cast %6 : vector<1x8x8x64xf32> to vector<64x64xf32>
    %c0_15 = arith.constant 0 : index
    %c0_16 = arith.constant 0 : index
    %c0_17 = arith.constant 0 : index
    %8 = vector.load %arg2[%c0_15, %c0_16, %c0_17] : memref<9x64x64xf32, #tpu.memory_space<vmem>>, vector<1x64x64xf32>
    %9 = vector.shape_cast %8 : vector<1x64x64xf32> to vector<64x64xf32>
    %cst_18 = arith.constant dense<0.000000e+00> : vector<64x64xf32>
    %10 = tpu.matmul %7, %9, %cst_18 {dimension_numbers = #tpu.dot_dimension_numbers<[1], [0], [0], [1], [0, 0, 1, 1], [], []>} : vector<64x64xf32>, vector<64x64xf32>, vector<64x64xf32> -> vector<64x64xf32>
    %11 = arith.addf %5, %10 : vector<64x64xf32>
    %12 = vector.extract_strided_slice %4 {offsets = [0, 0, 2, 0], sizes = [1, 8, 8, 64], strides = [1, 1, 1, 1]} : vector<1x12x12x64xf32> to vector<1x8x8x64xf32>
    %13 = vector.shape_cast %12 : vector<1x8x8x64xf32> to vector<64x64xf32>
    %c1_19 = arith.constant 1 : index
    %c0_20 = arith.constant 0 : index
    %c0_21 = arith.constant 0 : index
    %14 = vector.load %arg2[%c1_19, %c0_20, %c0_21] : memref<9x64x64xf32, #tpu.memory_space<vmem>>, vector<1x64x64xf32>
    %15 = vector.shape_cast %14 : vector<1x64x64xf32> to vector<64x64xf32>
    %cst_22 = arith.constant dense<0.000000e+00> : vector<64x64xf32>
    %16 = tpu.matmul %13, %15, %cst_22 {dimension_numbers = #tpu.dot_dimension_numbers<[1], [0], [0], [1], [0, 0, 1, 1], [], []>} : vector<64x64xf32>, vector<64x64xf32>, vector<64x64xf32> -> vector<64x64xf32>
    %17 = arith.addf %11, %16 : vector<64x64xf32>
    %18 = vector.extract_strided_slice %4 {offsets = [0, 0, 4, 0], sizes = [1, 8, 8, 64], strides = [1, 1, 1, 1]} : vector<1x12x12x64xf32> to vector<1x8x8x64xf32>
    %19 = vector.shape_cast %18 : vector<1x8x8x64xf32> to vector<64x64xf32>
    %c2 = arith.constant 2 : index
    %c0_23 = arith.constant 0 : index
    %c0_24 = arith.constant 0 : index
    %20 = vector.load %arg2[%c2, %c0_23, %c0_24] : memref<9x64x64xf32, #tpu.memory_space<vmem>>, vector<1x64x64xf32>
    %21 = vector.shape_cast %20 : vector<1x64x64xf32> to vector<64x64xf32>
    %cst_25 = arith.constant dense<0.000000e+00> : vector<64x64xf32>
    %22 = tpu.matmul %19, %21, %cst_25 {dimension_numbers = #tpu.dot_dimension_numbers<[1], [0], [0], [1], [0, 0, 1, 1], [], []>} : vector<64x64xf32>, vector<64x64xf32>, vector<64x64xf32> -> vector<64x64xf32>
    %23 = arith.addf %17, %22 : vector<64x64xf32>
    %24 = vector.extract_strided_slice %4 {offsets = [0, 2, 0, 0], sizes = [1, 8, 8, 64], strides = [1, 1, 1, 1]} : vector<1x12x12x64xf32> to vector<1x8x8x64xf32>
    %25 = vector.shape_cast %24 : vector<1x8x8x64xf32> to vector<64x64xf32>
    %c3 = arith.constant 3 : index
    %c0_26 = arith.constant 0 : index
    %c0_27 = arith.constant 0 : index
    %26 = vector.load %arg2[%c3, %c0_26, %c0_27] : memref<9x64x64xf32, #tpu.memory_space<vmem>>, vector<1x64x64xf32>
    %27 = vector.shape_cast %26 : vector<1x64x64xf32> to vector<64x64xf32>
    %cst_28 = arith.constant dense<0.000000e+00> : vector<64x64xf32>
    %28 = tpu.matmul %25, %27, %cst_28 {dimension_numbers = #tpu.dot_dimension_numbers<[1], [0], [0], [1], [0, 0, 1, 1], [], []>} : vector<64x64xf32>, vector<64x64xf32>, vector<64x64xf32> -> vector<64x64xf32>
    %29 = arith.addf %23, %28 : vector<64x64xf32>
    %30 = vector.extract_strided_slice %4 {offsets = [0, 2, 2, 0], sizes = [1, 8, 8, 64], strides = [1, 1, 1, 1]} : vector<1x12x12x64xf32> to vector<1x8x8x64xf32>
    %31 = vector.shape_cast %30 : vector<1x8x8x64xf32> to vector<64x64xf32>
    %c4 = arith.constant 4 : index
    %c0_29 = arith.constant 0 : index
    %c0_30 = arith.constant 0 : index
    %32 = vector.load %arg2[%c4, %c0_29, %c0_30] : memref<9x64x64xf32, #tpu.memory_space<vmem>>, vector<1x64x64xf32>
    %33 = vector.shape_cast %32 : vector<1x64x64xf32> to vector<64x64xf32>
    %cst_31 = arith.constant dense<0.000000e+00> : vector<64x64xf32>
    %34 = tpu.matmul %31, %33, %cst_31 {dimension_numbers = #tpu.dot_dimension_numbers<[1], [0], [0], [1], [0, 0, 1, 1], [], []>} : vector<64x64xf32>, vector<64x64xf32>, vector<64x64xf32> -> vector<64x64xf32>
    %35 = arith.addf %29, %34 : vector<64x64xf32>
    %36 = vector.extract_strided_slice %4 {offsets = [0, 2, 4, 0], sizes = [1, 8, 8, 64], strides = [1, 1, 1, 1]} : vector<1x12x12x64xf32> to vector<1x8x8x64xf32>
    %37 = vector.shape_cast %36 : vector<1x8x8x64xf32> to vector<64x64xf32>
    %c5 = arith.constant 5 : index
    %c0_32 = arith.constant 0 : index
    %c0_33 = arith.constant 0 : index
    %38 = vector.load %arg2[%c5, %c0_32, %c0_33] : memref<9x64x64xf32, #tpu.memory_space<vmem>>, vector<1x64x64xf32>
    %39 = vector.shape_cast %38 : vector<1x64x64xf32> to vector<64x64xf32>
    %cst_34 = arith.constant dense<0.000000e+00> : vector<64x64xf32>
    %40 = tpu.matmul %37, %39, %cst_34 {dimension_numbers = #tpu.dot_dimension_numbers<[1], [0], [0], [1], [0, 0, 1, 1], [], []>} : vector<64x64xf32>, vector<64x64xf32>, vector<64x64xf32> -> vector<64x64xf32>
    %41 = arith.addf %35, %40 : vector<64x64xf32>
    %42 = vector.extract_strided_slice %4 {offsets = [0, 4, 0, 0], sizes = [1, 8, 8, 64], strides = [1, 1, 1, 1]} : vector<1x12x12x64xf32> to vector<1x8x8x64xf32>
    %43 = vector.shape_cast %42 : vector<1x8x8x64xf32> to vector<64x64xf32>
    %c6 = arith.constant 6 : index
    %c0_35 = arith.constant 0 : index
    %c0_36 = arith.constant 0 : index
    %44 = vector.load %arg2[%c6, %c0_35, %c0_36] : memref<9x64x64xf32, #tpu.memory_space<vmem>>, vector<1x64x64xf32>
    %45 = vector.shape_cast %44 : vector<1x64x64xf32> to vector<64x64xf32>
    %cst_37 = arith.constant dense<0.000000e+00> : vector<64x64xf32>
    %46 = tpu.matmul %43, %45, %cst_37 {dimension_numbers = #tpu.dot_dimension_numbers<[1], [0], [0], [1], [0, 0, 1, 1], [], []>} : vector<64x64xf32>, vector<64x64xf32>, vector<64x64xf32> -> vector<64x64xf32>
    %47 = arith.addf %41, %46 : vector<64x64xf32>
    %48 = vector.extract_strided_slice %4 {offsets = [0, 4, 2, 0], sizes = [1, 8, 8, 64], strides = [1, 1, 1, 1]} : vector<1x12x12x64xf32> to vector<1x8x8x64xf32>
    %49 = vector.shape_cast %48 : vector<1x8x8x64xf32> to vector<64x64xf32>
    %c7 = arith.constant 7 : index
    %c0_38 = arith.constant 0 : index
    %c0_39 = arith.constant 0 : index
    %50 = vector.load %arg2[%c7, %c0_38, %c0_39] : memref<9x64x64xf32, #tpu.memory_space<vmem>>, vector<1x64x64xf32>
    %51 = vector.shape_cast %50 : vector<1x64x64xf32> to vector<64x64xf32>
    %cst_40 = arith.constant dense<0.000000e+00> : vector<64x64xf32>
    %52 = tpu.matmul %49, %51, %cst_40 {dimension_numbers = #tpu.dot_dimension_numbers<[1], [0], [0], [1], [0, 0, 1, 1], [], []>} : vector<64x64xf32>, vector<64x64xf32>, vector<64x64xf32> -> vector<64x64xf32>
    %53 = arith.addf %47, %52 : vector<64x64xf32>
    %54 = vector.extract_strided_slice %4 {offsets = [0, 4, 4, 0], sizes = [1, 8, 8, 64], strides = [1, 1, 1, 1]} : vector<1x12x12x64xf32> to vector<1x8x8x64xf32>
    %55 = vector.shape_cast %54 : vector<1x8x8x64xf32> to vector<64x64xf32>
    %c8 = arith.constant 8 : index
    %c0_41 = arith.constant 0 : index
    %c0_42 = arith.constant 0 : index
    %56 = vector.load %arg2[%c8, %c0_41, %c0_42] : memref<9x64x64xf32, #tpu.memory_space<vmem>>, vector<1x64x64xf32>
    %57 = vector.shape_cast %56 : vector<1x64x64xf32> to vector<64x64xf32>
    %cst_43 = arith.constant dense<0.000000e+00> : vector<64x64xf32>
    %58 = tpu.matmul %55, %57, %cst_43 {dimension_numbers = #tpu.dot_dimension_numbers<[1], [0], [0], [1], [0, 0, 1, 1], [], []>} : vector<64x64xf32>, vector<64x64xf32>, vector<64x64xf32> -> vector<64x64xf32>
    %59 = arith.addf %53, %58 : vector<64x64xf32>
    %c0_44 = arith.constant 0 : index
    %c0_45 = arith.constant 0 : index
    %60 = vector.load %arg3[%c0_44, %c0_45] : memref<1x64xf32, #tpu.memory_space<vmem>>, vector<1x64xf32>
    %61 = vector.broadcast %60 : vector<1x64xf32> to vector<64x64xf32>
    %62 = arith.addf %59, %61 : vector<64x64xf32>
    %63 = vector.shape_cast %62 : vector<64x64xf32> to vector<1x64x64xf32>
    %64 = tpu.transpose %63, [0, 2, 1] : vector<1x64x64xf32> -> vector<1x64x64xf32>
    %65 = vector.shape_cast %64 : vector<1x64x64xf32> to vector<1x1x4096xf32>
    %c0_46 = arith.constant 0 : index
    %c0_47 = arith.constant 0 : index
    %c0_48 = arith.constant 0 : index
    %66 = vector.load %arg4[%c0_46, %c0_47, %c0_48] : memref<1x1x4096xf32, #tpu.memory_space<vmem>>, vector<1x1x4096xf32>
    tpu.vector_store %arg4[%c0_46, %c0_47, %c0_48], %65 {strides = array<i32>} : memref<1x1x4096xf32, #tpu.memory_space<vmem>>, vector<1x1x4096xf32>,
    return
  }
  func.func @transform_0(%arg0: i32) -> (i32, i32, i32, i32) {
    %c0_i32 = arith.constant 0 : i32
    %c0_i32_0 = arith.constant 0 : i32
    %c0_i32_1 = arith.constant 0 : i32
    %c0_i32_2 = arith.constant 0 : i32
    return %arg0, %c0_i32, %c0_i32_0, %c0_i32_1 : i32, i32, i32, i32
  }
  func.func @transform_1(%arg0: i32) -> (i32, i32, i32) {
    %c0_i32 = arith.constant 0 : i32
    %c0_i32_0 = arith.constant 0 : i32
    %c0_i32_1 = arith.constant 0 : i32
    %c0_i32_2 = arith.constant 0 : i32
    return %c0_i32, %c0_i32_0, %c0_i32_1 : i32, i32, i32
  }
  func.func @transform_2(%arg0: i32) -> (i32, i32) {
    %c0_i32 = arith.constant 0 : i32
    %c0_i32_0 = arith.constant 0 : i32
    %c0_i32_1 = arith.constant 0 : i32
    return %c0_i32, %c0_i32_0 : i32, i32
  }
  func.func @transform_3(%arg0: i32) -> (i32, i32, i32) {
    %c0_i32 = arith.constant 0 : i32
    %c0_i32_0 = arith.constant 0 : i32
    %c0_i32_1 = arith.constant 0 : i32
    return %arg0, %c0_i32, %c0_i32_0 : i32, i32, i32
  }
}

</mosaic_0001>

<llo_original>
// kernel: tpu_custom_call.1
$region0: #{tpu_custom_call.1}
  #allocation0 [shape = 'u32[]', space=smem, size = 0x4, offset = 0x4, fixed_abs, tag = 'smem constant byte address 0x4 - core index']
  #allocation1 [shape = 'u32[144,128]{1,0:T(1,128)}', space=vmem, size = 0x12000, scoped, tag = 'internal scratch']
  #allocation2 [shape = 'f32[1,12,12,64]{3,2,1,0:T(8,128)}', space=vmem, size = 0x18000, scoped, tag = 'scratch operand']
  %s0 = inlined_call_operand.vmem [shape: f32[2,10,10,64], index: 0, kind: input, shape index: {}]
  %s1 = inlined_call_operand.hbm [shape: f32[9,64,64], index: 1, kind: input, shape index: {}]
  %s2 = inlined_call_operand.vmem [shape: f32[1,64], index: 2, kind: input, shape index: {}]
  %s3 = inlined_call_operand.hbm [shape: f32[2,1,4096], index: 3, kind: output, shape index: {}]
  %s4 = sld [smem:[#allocation0]]
  $region49: #{tpu_custom_call.1} parent=0
    _
  %s6 = ssub.s32 1, %s4
  %s7 = scalar_select 0, %s6, %s4
  $region1: #{tpu_custom_call.1} parent=0
    #allocation3 [shape = 'u8[294912]{0}', space=vmem, size = 0x48000, scoped, tag = 'input window, operand 1, single buffered']
    #allocation4 [shape = 's32[2]{0}', space=sflag, size = 0x8, scoped, tag = 'scoped memory for tpu_custom_call.1']
    #allocation5 [shape = 's32[2]{0}', space=sflag, size = 0x8, scoped, tag = 'scoped memory for tpu_custom_call.1']
    #allocation6 [shape = 'u8[32768]{0}', space=vmem, size = 0x8000, scoped, tag = 'output window, operand 0']
    %8 = vsyncpa [#allocation4], 0
    %9 = vsyncpa [#allocation5], 0
    %s10 = scalar_lea.sflag [#allocation5], 1
    %11 = vsyncpa %s10, 0
    loop: start=0, step=1, limit=4
    $region2: #{tpu_custom_call.1} parent=1 // loop_pre_header
      _
    $region3: #{tpu_custom_call.1} parent=1 // loop_header
      %s13 = sphi 0, %s17
      %p14 = scmp.ge.s32.totalorder %s13, 4
      %s23 = sphi 0, %s25
      %s26 = sphi 0, %s23
      %s27 = sphi 0, %s26
      %s43 = sphi 0, %s27
      %s47 = sphi 0, %s47
      %s49 = sphi 0, %s47
      %s50 = sphi 0, %s49
      %s64 = sphi 0, %s50
      %s68 = sphi 0, %s68
      %s70 = sphi 0, %s68
      %s71 = sphi 0, %s70
      %s85 = sphi 0, %s71
      %s91 = sphi 0, %s93
      %s94 = sphi 0, %s91
      %s95 = sphi 0, %s94
      %s111 = sphi 0, %s95
    $region4: #{tpu_custom_call.1} parent=1 // loop_header_branch
      %16 = sbr.rel (%p14) target = $region8
    $region5: #{tpu_custom_call.1} parent=1 // loop_body
      %s18 = ssub.s32 %s13, 1
      %s19 = ssub.s32 %s13, 2
      %s20 = sadd.s32 %s13, 1
      %s21 = ssub.s32 %s13, %s20
      %p22 = scmp.eq.s32.totalorder %s21, 0
      %s24 = sadd.s32 %s23, 1
      %s25 = scalar_select %p22, %s23, %s24
      %p28 = pneg %p22
      %p29 = scmp.eq.s32.totalorder %s13, 1
      %p30 = por %p28, %p29
      %p31 = scmp.ne.s32.totalorder %s23, %s26
      %p32 = scmp.eq.s32.totalorder %s13, 0
      %p33 = por %p31, %p32
      %p34 = scmp.ne.s32.totalorder %s23, %s26
      %p35 = scmp.eq.s32.totalorder %s18, 1
      %p36 = por %p34, %p35
      %p37 = scmp.ne.s32.totalorder %s26, %s27
      %p38 = scmp.eq.s32.totalorder %s18, 0
      %p39 = por %p37, %p38
      %p40 = scmp.ne.s32.totalorder %s26, %s27
      %p41 = scmp.eq.s32.totalorder %s19, 1
      %p42 = por %p40, %p41
      %p44 = scmp.ne.s32.totalorder %s27, %s43
      %p45 = scmp.eq.s32.totalorder %s19, 0
      %p46 = por %p44, %p45
      %s48 = sadd.s32 %s47, 1
      %p51 = scmp.eq.s32.totalorder %s13, 1
      %p52 = scmp.ne.s32.totalorder %s47, %s49
      %p53 = scmp.eq.s32.totalorder %s13, 0
      %p54 = por %p52, %p53
      %p55 = scmp.ne.s32.totalorder %s47, %s49
      %p56 = scmp.eq.s32.totalorder %s18, 1
      %p57 = por %p55, %p56
      %p58 = scmp.ne.s32.totalorder %s49, %s50
      %p59 = scmp.eq.s32.totalorder %s18, 0
      %p60 = por %p58, %p59
      %p61 = scmp.ne.s32.totalorder %s49, %s50
      %p62 = scmp.eq.s32.totalorder %s19, 1
      %p63 = por %p61, %p62
      %p65 = scmp.ne.s32.totalorder %s50, %s64
      %p66 = scmp.eq.s32.totalorder %s19, 0
      %p67 = por %p65, %p66
      %s69 = sadd.s32 %s68, 1
      %p72 = scmp.eq.s32.totalorder %s13, 1
      %p73 = scmp.ne.s32.totalorder %s68, %s70
      %p74 = scmp.eq.s32.totalorder %s13, 0
      %p75 = por %p73, %p74
      %p76 = scmp.ne.s32.totalorder %s68, %s70
      %p77 = scmp.eq.s32.totalorder %s18, 1
      %p78 = por %p76, %p77
      %p79 = scmp.ne.s32.totalorder %s70, %s71
      %p80 = scmp.eq.s32.totalorder %s18, 0
      %p81 = por %p79, %p80
      %p82 = scmp.ne.s32.totalorder %s70, %s71
      %p83 = scmp.eq.s32.totalorder %s19, 1
      %p84 = por %p82, %p83
      %p86 = scmp.ne.s32.totalorder %s71, %s85
      %p87 = scmp.eq.s32.totalorder %s19, 0
      %p88 = por %p86, %p87
      %s89 = ssub.s32 %s13, %s20
      %p90 = scmp.eq.s32.totalorder %s89, 0
      %s92 = sadd.s32 %s91, 1
      %s93 = scalar_select %p90, %s91, %s92
      %p96 = pneg %p90
      %p97 = scmp.eq.s32.totalorder %s13, 1
      %p98 = por %p96, %p97
      %p99 = scmp.ne.s32.totalorder %s91, %s94
      %p100 = scmp.eq.s32.totalorder %s13, 0
      %p101 = por %p99, %p100
      %p102 = scmp.ne.s32.totalorder %s91, %s94
      %p103 = scmp.eq.s32.totalorder %s18, 1
      %p104 = por %p102, %p103
      %p105 = scmp.ne.s32.totalorder %s94, %s95
      %p106 = scmp.eq.s32.totalorder %s18, 0
      %p107 = por %p105, %p106
      %p108 = scmp.ne.s32.totalorder %s94, %s95
      %p109 = scmp.eq.s32.totalorder %s19, 1
      %p110 = por %p108, %p109
      %p112 = scmp.ne.s32.totalorder %s95, %s111
      %p113 = scmp.eq.s32.totalorder %s19, 0
      %p114 = por %p112, %p113
      %p115 = scmp.le.s32.totalorder 1, %s13
      %p116 = scmp.lt.s32.totalorder %s13, 3
      %p117 = pnand %p115, %p116
      %p118 = pneg %p117
      // Predicated region
      $region9: #{tpu_custom_call.1} parent=5 // pred_check
        _
      $region10: #{tpu_custom_call.1} parent=5 // pred_check_branch
        %120 = sbr.rel (%p117) target = $region12
      $region11: #{tpu_custom_call.1} parent=5 // pred_region
        %s121 = ssub.s32 %s13, 1
        // Predicated region
        $region13: #{tpu_custom_call.1} parent=11 // pred_check
          %p122 = pneg %p60
        $region14: #{tpu_custom_call.1} parent=11 // pred_check_branch
          %124 = sbr.rel (%p122) target = $region16
        $region15: #{tpu_custom_call.1} parent=11 // pred_region
          %s126 = ssub.s32 9216, 9216
          %127 = vsyncadd [#allocation4], %s126
          %s128 = sshll.u32 [#allocation3], 4
          %s129 = int_to_ptr.vmem [resolvable:$true] %s128
          %134 = dma.hbm_to_vmem [thread:$0]  %s1, 9216, %s129, [#allocation4], 128, 128, 8
        $region16: #{tpu_custom_call.1} parent=11 // pred_fallthru
          _
        // Predicated region
        $region17: #{tpu_custom_call.1} parent=11 // pred_check
          %p135 = pneg %p81
        $region18: #{tpu_custom_call.1} parent=11 // pred_check_branch
          %137 = sbr.rel (%p135) target = $region20
        $region19: #{tpu_custom_call.1} parent=11 // pred_region
          _
        $region20: #{tpu_custom_call.1} parent=11 // pred_fallthru
          _
      $region12: #{tpu_custom_call.1} parent=5 // pred_fallthru
        _
      %p138 = scmp.lt.s32.totalorder %s13, 2
      // Predicated region
      $region21: #{tpu_custom_call.1} parent=5 // pred_check
        %p139 = pneg %p138
      $region22: #{tpu_custom_call.1} parent=5 // pred_check_branch
        %141 = sbr.rel (%p139) target = $region24
      $region23: #{tpu_custom_call.1} parent=5 // pred_region
        // Predicated region
        $region25: #{tpu_custom_call.1} parent=23 // pred_check
          %p142 = pneg %p33
        $region26: #{tpu_custom_call.1} parent=23 // pred_check_branch
          %144 = sbr.rel (%p142) target = $region28
        $region27: #{tpu_custom_call.1} parent=23 // pred_region
          %p145 = scmp.lt.s32.totalorder %s13, 1
          %s146 = scalar_select %p145, %s13, 1
          %s147 = smul.addr %s146, 20
          %s148 = smul.addr %s147, 8
          %s149 = scalar_lea.vmem %s0, %s148
        $region28: #{tpu_custom_call.1} parent=23 // pred_fallthru
          _
      $region24: #{tpu_custom_call.1} parent=5 // pred_fallthru
        _
      %p150 = scmp.le.s32.totalorder 1, %s13
      %p151 = scmp.lt.s32.totalorder %s13, 3
      %p152 = pnand %p150, %p151
      %p153 = pneg %p152
      // Predicated region
      $region29: #{tpu_custom_call.1} parent=5 // pred_check
        _
      $region30: #{tpu_custom_call.1} parent=5 // pred_check_branch
        %155 = sbr.rel (%p152) target = $region32
      $region31: #{tpu_custom_call.1} parent=5 // pred_region
        %s156 = ssub.s32 %s13, 1
        // Predicated region
        $region33: #{tpu_custom_call.1} parent=31 // pred_check
          %p157 = pneg %p60
        $region34: #{tpu_custom_call.1} parent=31 // pred_check_branch
          %159 = sbr.rel (%p157) target = $region36
        $region35: #{tpu_custom_call.1} parent=31 // pred_region
          %160 = dma.done [#allocation4], 9216
        $region36: #{tpu_custom_call.1} parent=31 // pred_fallthru
          _
        %p161 = scmp.lt.s32.totalorder %s18, 1
        %s162 = scalar_select %p161, %s18, 1
        %s163 = smul.addr %s162, 20
        %s164 = smul.addr %s163, 8
        %s165 = scalar_lea.vmem %s0, %s164
        %p166 = pneg %p39
        %p167 = pneg %p36
        %p168 = pneg %p60
        %p169 = pneg %p57
        %p170 = pneg %p81
        %p171 = pneg %p78
        %p172 = pneg %p107
        %p173 = pneg %p104
        %s174 = sand.u32 %s94, 1
        %s175 = scalar_lea.sflag [#allocation5], %s174
        %s176 = sand.u32 %s94, 1
        %s177 = smul.addr %s176, 32
        %s178 = scalar_lea.vmem [#allocation6], %s177
        %p179 = scmp.lt.s32.totalorder %s18, 1
        %s180 = scalar_select %p179, %s18, 1
        %s181 = smul.addr %s180, 20
        %s182 = smul.addr %s181, 8
        %s183 = scalar_lea.vmem %s0, %s182
        %vm184 = vcmask 523264
        %185 = vst.msk [vmem:[#allocation2] sm:$0xff] %vm184, 0.0
        %vm186 = vcmask 519168
        %187 = vst.msk [vmem:[#allocation2 + $0x8] sm:$0xf] %vm186, 0.0
        %188 = vst.msk [vmem:[#allocation2 + $0x10] sm:$0xff] %vm184, 0.0
        %189 = vst.msk [vmem:[#allocation2 + $0x18] sm:$0xf] %vm186, 0.0
        %190 = vst.msk [vmem:[#allocation2 + $0x20] sm:$0xff] %vm184, 0.0
        %191 = vst.msk [vmem:[#allocation2 + $0x28] sm:$0xf] %vm186, 0.0
        %192 = vst.msk [vmem:[#allocation2 + $0x30] sm:$0xff] %vm184, 0.0
        %193 = vst.msk [vmem:[#allocation2 + $0x38] sm:$0xf] %vm186, 0.0
        %194 = vst.msk [vmem:[#allocation2 + $0x40] sm:$0xff] %vm184, 0.0
        %195 = vst.msk [vmem:[#allocation2 + $0x48] sm:$0xf] %vm186, 0.0
        %196 = vst.msk [vmem:[#allocation2 + $0x50] sm:$0xff] %vm184, 0.0
        %197 = vst.msk [vmem:[#allocation2 + $0x58] sm:$0xf] %vm186, 0.0
        %198 = vst.msk [vmem:[#allocation2 + $0x60] sm:$0xff] %vm184, 0.0
        %199 = vst.msk [vmem:[#allocation2 + $0x68] sm:$0xf] %vm186, 0.0
        %200 = vst.msk [vmem:[#allocation2 + $0x70] sm:$0xff] %vm184, 0.0
        %201 = vst.msk [vmem:[#allocation2 + $0x78] sm:$0xf] %vm186, 0.0
        %202 = vst.msk [vmem:[#allocation2 + $0x80] sm:$0xff] %vm184, 0.0
        %203 = vst.msk [vmem:[#allocation2 + $0x88] sm:$0xf] %vm186, 0.0
        %204 = vst.msk [vmem:[#allocation2 + $0x90] sm:$0xff] %vm184, 0.0
        %205 = vst.msk [vmem:[#allocation2 + $0x98] sm:$0xf] %vm186, 0.0
        %206 = vst.msk [vmem:[#allocation2 + $0xa0] sm:$0xff] %vm184, 0.0
        %207 = vst.msk [vmem:[#allocation2 + $0xa8] sm:$0xf] %vm186, 0.0
        %208 = vst.msk [vmem:[#allocation2 + $0xb0] sm:$0xff] %vm184, 0.0
        %209 = vst.msk [vmem:[#allocation2 + $0xb8] sm:$0xf] %vm186, 0.0
        %v210 = vld [vmem:[%s183] sm:$0xff]
        %v211 = vld [vmem:[%s183 + $0x8] sm:$0x3]
        %v212 = vld [vmem:[%s183 + $0x10] sm:$0xff]
        %v213 = vld [vmem:[%s183 + $0x18] sm:$0x3]
        %v214 = vld [vmem:[%s183 + $0x20] sm:$0xff]
        %v215 = vld [vmem:[%s183 + $0x28] sm:$0x3]
        %v216 = vld [vmem:[%s183 + $0x30] sm:$0xff]
        %v217 = vld [vmem:[%s183 + $0x38] sm:$0x3]
        %v218 = vld [vmem:[%s183 + $0x40] sm:$0xff]
        %v219 = vld [vmem:[%s183 + $0x48] sm:$0x3]
        %v220 = vld [vmem:[%s183 + $0x50] sm:$0xff]
        %v221 = vld [vmem:[%s183 + $0x58] sm:$0x3]
        %v222 = vld [vmem:[%s183 + $0x60] sm:$0xff]
        %v223 = vld [vmem:[%s183 + $0x68] sm:$0x3]
        %v224 = vld [vmem:[%s183 + $0x70] sm:$0xff]
        %v225 = vld [vmem:[%s183 + $0x78] sm:$0x3]
        %v226 = vld [vmem:[%s183 + $0x80] sm:$0xff]
        %v227 = vld [vmem:[%s183 + $0x88] sm:$0x3]
        %v228 = vld [vmem:[%s183 + $0x90] sm:$0xff]
        %v229 = vld [vmem:[%s183 + $0x98] sm:$0x3]
        %s230 = scalar_lea.vmem [#allocation2], 16
        %231 = vst.msk [vmem:[%s230 + $0x1] sm:$0xff] %vm184, %v210
        %vm232 = vcmask 517120
        %233 = vst.msk [vmem:[%s230 + $0x9] sm:$0x3] %vm232, %v211
        %234 = vst.msk [vmem:[%s230 + $0x11] sm:$0xff] %vm184, %v212
        %235 = vst.msk [vmem:[%s230 + $0x19] sm:$0x3] %vm232, %v213
        %236 = vst.msk [vmem:[%s230 + $0x21] sm:$0xff] %vm184, %v214
        %237 = vst.msk [vmem:[%s230 + $0x29] sm:$0x3] %vm232, %v215
        %238 = vst.msk [vmem:[%s230 + $0x31] sm:$0xff] %vm184, %v216
        %239 = vst.msk [vmem:[%s230 + $0x39] sm:$0x3] %vm232, %v217
        %240 = vst.msk [vmem:[%s230 + $0x41] sm:$0xff] %vm184, %v218
        %241 = vst.msk [vmem:[%s230 + $0x49] sm:$0x3] %vm232, %v219
        %242 = vst.msk [vmem:[%s230 + $0x51] sm:$0xff] %vm184, %v220
        %243 = vst.msk [vmem:[%s230 + $0x59] sm:$0x3] %vm232, %v221
        %244 = vst.msk [vmem:[%s230 + $0x61] sm:$0xff] %vm184, %v222
        %245 = vst.msk [vmem:[%s230 + $0x69] sm:$0x3] %vm232, %v223
        %246 = vst.msk [vmem:[%s230 + $0x71] sm:$0xff] %vm184, %v224
        %247 = vst.msk [vmem:[%s230 + $0x79] sm:$0x3] %vm232, %v225
        %248 = vst.msk [vmem:[%s230 + $0x81] sm:$0xff] %vm184, %v226
        %249 = vst.msk [vmem:[%s230 + $0x89] sm:$0x3] %vm232, %v227
        %250 = vst.msk [vmem:[%s230 + $0x91] sm:$0xff] %vm184, %v228
        %251 = vst.msk [vmem:[%s230 + $0x99] sm:$0x3] %vm232, %v229
        %v252 = vld [vmem:[#allocation2] sm:$0xff]
        %v253 = vld [vmem:[#allocation2 + $0x8] sm:$0xf]
        %v254 = vld [vmem:[#allocation2 + $0x10] sm:$0xff]
        %v255 = vld [vmem:[#allocation2 + $0x18] sm:$0xf]
        %v256 = vld [vmem:[#allocation2 + $0x20] sm:$0xff]
        %v257 = vld [vmem:[#allocation2 + $0x28] sm:$0xf]
        %v258 = vld [vmem:[#allocation2 + $0x30] sm:$0xff]
        %v259 = vld [vmem:[#allocation2 + $0x38] sm:$0xf]
        %v260 = vld [vmem:[#allocation2 + $0x40] sm:$0xff]
        %v261 = vld [vmem:[#allocation2 + $0x48] sm:$0xf]
        %v262 = vld [vmem:[#allocation2 + $0x50] sm:$0xff]
        %v263 = vld [vmem:[#allocation2 + $0x58] sm:$0xf]
        %v264 = vld [vmem:[#allocation2 + $0x60] sm:$0xff]
        %v265 = vld [vmem:[#allocation2 + $0x68] sm:$0xf]
        %v266 = vld [vmem:[#allocation2 + $0x70] sm:$0xff]
        %v267 = vld [vmem:[#allocation2 + $0x78] sm:$0xf]
        %v268 = vld [vmem:[#allocation2 + $0x80] sm:$0xff]
        %v269 = vld [vmem:[#allocation2 + $0x88] sm:$0xf]
        %v270 = vld [vmem:[#allocation2 + $0x90] sm:$0xff]
        %v271 = vld [vmem:[#allocation2 + $0x98] sm:$0xf]
        %v272 = vld [vmem:[#allocation2 + $0xa0] sm:$0xff]
        %v273 = vld [vmem:[#allocation2 + $0xa8] sm:$0xf]
        %v274 = vld [vmem:[#allocation2 + $0xb0] sm:$0xff]
        %v275 = vld [vmem:[#allocation2 + $0xb8] sm:$0xf]
        %v276 = vld [vmem:[#allocation3] sm:$0xff]
        %v277 = vld [vmem:[#allocation3 + $0x8] sm:$0xff]
        %v278 = vld [vmem:[#allocation3 + $0x10] sm:$0xff]
        %v279 = vld [vmem:[#allocation3 + $0x18] sm:$0xff]
        %v280 = vld [vmem:[#allocation3 + $0x20] sm:$0xff]
        %v281 = vld [vmem:[#allocation3 + $0x28] sm:$0xff]
        %v282 = vld [vmem:[#allocation3 + $0x30] sm:$0xff]
        %v283 = vld [vmem:[#allocation3 + $0x38] sm:$0xff]
        %vm300 = vcmask 1045504
        %v301 = vrot.slane %v252, 2
        %v302 = vrot.slane %v253, 2
        %v303 = vsel %vm300, %v301, %v302
        %v304 = vrot.slane %v254, 2
        %v305 = vrot.slane %v255, 2
        %v306 = vsel %vm300, %v304, %v305
        %v307 = vrot.slane %v256, 2
        %v308 = vrot.slane %v257, 2
        %v309 = vsel %vm300, %v307, %v308
        %v310 = vrot.slane %v258, 2
        %v311 = vrot.slane %v259, 2
        %v312 = vsel %vm300, %v310, %v311
        %v313 = vrot.slane %v260, 2
        %v314 = vrot.slane %v261, 2
        %v315 = vsel %vm300, %v313, %v314
        %v316 = vrot.slane %v262, 2
        %v317 = vrot.slane %v263, 2
        %v318 = vsel %vm300, %v316, %v317
        %v319 = vrot.slane %v264, 2
        %v320 = vrot.slane %v265, 2
        %v321 = vsel %vm300, %v319, %v320
        %v322 = vrot.slane %v266, 2
        %v323 = vrot.slane %v267, 2
        %v324 = vsel %vm300, %v322, %v323
        %s325 = scalar_lea.vmem [#allocation3], 64
        %v326 = vld [vmem:[%s325] sm:$0xff]
        %v327 = vld [vmem:[%s325 + $0x8] sm:$0xff]
        %v328 = vld [vmem:[%s325 + $0x10] sm:$0xff]
        %v329 = vld [vmem:[%s325 + $0x18] sm:$0xff]
        %v330 = vld [vmem:[%s325 + $0x20] sm:$0xff]
        %v331 = vld [vmem:[%s325 + $0x28] sm:$0xff]
        %v332 = vld [vmem:[%s325 + $0x30] sm:$0xff]
        %v333 = vld [vmem:[%s325 + $0x38] sm:$0xff]
        %v334 = vsel %vm184, %v303, 0
        %v336 = vsel %vm184, %v306, 0
        %v338 = vsel %vm184, %v309, 0
        %v340 = vsel %vm184, %v312, 0
        %v342 = vsel %vm184, %v315, 0
        %v344 = vsel %vm184, %v318, 0
        %v346 = vsel %vm184, %v321, 0
        %v348 = vsel %vm184, %v324, 0
        %350 = vmatprep.subr.mxu0 0.0
        %351 = vmatpush1.msra.mxu0 %v326
        %352 = vmatprep.subr.mxu0 0.0
        %353 = vmatpush1.msra.mxu0 %v327
        %354 = vmatprep.subr.mxu0 0.0
        %355 = vmatpush1.msra.mxu0 %v328
        %356 = vmatprep.subr.mxu0 0.0
        %357 = vmatpush1.msra.mxu0 %v329
        %358 = vmatprep.subr.mxu0 0.0
        %359 = vmatpush1.msra.mxu0 %v330
        %360 = vmatprep.subr.mxu0 0.0
        %361 = vmatpush1.msra.mxu0 %v331
        %362 = vmatprep.subr.mxu0 0.0
        %363 = vmatpush1.msra.mxu0 %v332
        %364 = vmatprep.subr.mxu0 0.0
        %365 = vmatpush1.msra.mxu0 %v333
        %366 = vmatprep.subr.mxu0 0.0
        %367 = vmatpush1.msra.mxu0 0.0
        %368 = vmatprep.subr.mxu0 0.0
        %369 = vmatpush1.msra.mxu0 0.0
        %370 = vmatprep.subr.mxu0 0.0
        %371 = vmatpush1.msra.mxu0 0.0
        %372 = vmatprep.subr.mxu0 0.0
        %373 = vmatpush1.msra.mxu0 0.0
        %374 = vmatprep.subr.mxu0 0.0
        %375 = vmatpush1.msra.mxu0 0.0
        %376 = vmatprep.subr.mxu0 0.0
        %377 = vmatpush1.msra.mxu0 0.0
        %378 = vmatprep.subr.mxu0 0.0
        %379 = vmatpush1.msra.mxu0 0.0
        %380 = vmatprep.subr.mxu0 0.0
        %381 = vmatpush1.msra.mxu0 0.0
        %382 = vmatprep.subr.mxu0 0.0
        %383 = vmatpush1.msra.mxu0 0.0
        %384 = vmatprep.subr.mxu0 0.0
        %385 = vmatpush1.msra.mxu0 0.0
        %386 = vmatprep.subr.mxu0 0.0
        %387 = vmatpush1.msra.mxu0 0.0
        %388 = vmatprep.subr.mxu0 0.0
        %389 = vmatpush1.msra.mxu0 0.0
        %390 = vmatprep.subr.mxu0 0.0
        %391 = vmatpush1.msra.mxu0 0.0
        %392 = vmatprep.subr.mxu0 0.0
        %393 = vmatpush1.msra.mxu0 0.0
        %394 = vmatprep.subr.mxu0 0.0
        %395 = vmatpush1.msra.mxu0 0.0
        %396 = vmatprep.subr.mxu0 0.0
        %397 = vmatpush1.msra.mxu0 0.0
        %398 = vmatprep.subr.mxu0 0.0
        %399 = vmatpush1.msra.mxu0 0.0
        %400 = vmatprep.subr.mxu0 0.0
        %401 = vmatpush1.msra.mxu0 0.0
        %402 = vmatprep.subr.mxu0 0.0
        %403 = vmatpush1.msra.mxu0 0.0
        %404 = vmatprep.subr.mxu0 0.0
        %405 = vmatpush1.msra.mxu0 0.0
        %406 = vmatprep.subr.mxu0 0.0
        %407 = vmatpush1.msra.mxu0 0.0
        %408 = vmatprep.subr.mxu0 0.0
        %409 = vmatpush1.msra.mxu0 0.0
        %410 = vmatprep.subr.mxu0 0.0
        %411 = vmatpush1.msra.mxu0 0.0
        %412 = vmatprep.subr.mxu0 0.0
        %413 = vmatpush1.msra.mxu0 0.0
        %414 = vmatprep.mubr.f32.mxu0 0.0
        %415 = vmatmul.mubr.f32.gmra.mrb[0].mxu0 %v334
        %v416 = vpop.f32.mrb[0].mxu0
        %v417 = vadd.f32 0.0, %v416
        %v418 = vpop.f32.mrb[0].mxu0
        %419 = vmatprep.mubr.f32.mxu0 0.0
        %420 = vmatmul.mubr.f32.gmra.mrb[0].mxu0 %v336
        %v421 = vpop.f32.mrb[0].mxu0
        %v422 = vadd.f32 0.0, %v421
        %v423 = vpop.f32.mrb[0].mxu0
        %424 = vmatprep.mubr.f32.mxu0 0.0
        %425 = vmatmul.mubr.f32.gmra.mrb[0].mxu0 %v338
        %v426 = vpop.f32.mrb[0].mxu0
        %v427 = vadd.f32 0.0, %v426
        %v428 = vpop.f32.mrb[0].mxu0
        %429 = vmatprep.mubr.f32.mxu0 0.0
        %430 = vmatmul.mubr.f32.gmra.mrb[0].mxu0 %v340
        %v431 = vpop.f32.mrb[0].mxu0
        %v432 = vadd.f32 0.0, %v431
        %v433 = vpop.f32.mrb[0].mxu0
        %434 = vmatprep.mubr.f32.mxu0 0.0
        %435 = vmatmul.mubr.f32.gmra.mrb[0].mxu0 %v342
        %v436 = vpop.f32.mrb[0].mxu0
        %v437 = vadd.f32 0.0, %v436
        %v438 = vpop.f32.mrb[0].mxu0
        %439 = vmatprep.mubr.f32.mxu0 0.0
        %440 = vmatmul.mubr.f32.gmra.mrb[0].mxu0 %v344
        %v441 = vpop.f32.mrb[0].mxu0
        %v442 = vadd.f32 0.0, %v441
        %v443 = vpop.f32.mrb[0].mxu0
        %444 = vmatprep.mubr.f32.mxu0 0.0
        %445 = vmatmul.mubr.f32.gmra.mrb[0].mxu0 %v346
        %v446 = vpop.f32.mrb[0].mxu0
        %v447 = vadd.f32 0.0, %v446
        %v448 = vpop.f32.mrb[0].mxu0
        %449 = vmatprep.mubr.f32.mxu0 0.0
        %450 = vmatmul.mubr.f32.gmra.mrb[0].mxu0 %v348
        %v451 = vpop.f32.mrb[0].mxu0
        %v452 = vadd.f32 0.0, %v451
        %v453 = vpop.f32.mrb[0].mxu0
        %454 = vdwg.mxu0
        %v455 = vsel %vm184, %v252, 0
        %v457 = vsel %vm184, %v254, 0
        %v459 = vsel %vm184, %v256, 0
        %v461 = vsel %vm184, %v258, 0
        %v463 = vsel %vm184, %v260, 0
        %v465 = vsel %vm184, %v262, 0
        %v467 = vsel %vm184, %v264, 0
        %v469 = vsel %vm184, %v266, 0
        %471 = vmatprep.subr.mxu0 0.0
        %472 = vmatpush1.msra.mxu0 %v276
        %473 = vmatprep.subr.mxu0 0.0
        %474 = vmatpush1.msra.mxu0 %v277
        %475 = vmatprep.subr.mxu0 0.0
        %476 = vmatpush1.msra.mxu0 %v278
        %477 = vmatprep.subr.mxu0 0.0
        %478 = vmatpush1.msra.mxu0 %v279
        %479 = vmatprep.subr.mxu0 0.0
        %480 = vmatpush1.msra.mxu0 %v280
        %481 = vmatprep.subr.mxu0 0.0
        %482 = vmatpush1.msra.mxu0 %v281
        %483 = vmatprep.subr.mxu0 0.0
        %484 = vmatpush1.msra.mxu0 %v282
        %485 = vmatprep.subr.mxu0 0.0
        %486 = vmatpush1.msra.mxu0 %v283
        %487 = vmatprep.subr.mxu0 0.0
        %488 = vmatpush1.msra.mxu0 0.0
        %489 = vmatprep.subr.mxu0 0.0
        %490 = vmatpush1.msra.mxu0 0.0
        %491 = vmatprep.subr.mxu0 0.0
        %492 = vmatpush1.msra.mxu0 0.0
        %493 = vmatprep.subr.mxu0 0.0
        %494 = vmatpush1.msra.mxu0 0.0
        %495 = vmatprep.subr.mxu0 0.0
        %496 = vmatpush1.msra.mxu0 0.0
        %497 = vmatprep.subr.mxu0 0.0
        %498 = vmatpush1.msra.mxu0 0.0
        %499 = vmatprep.subr.mxu0 0.0
        %500 = vmatpush1.msra.mxu0 0.0
        %501 = vmatprep.subr.mxu0 0.0
        %502 = vmatpush1.msra.mxu0 0.0
        %503 = vmatprep.subr.mxu0 0.0
        %504 = vmatpush1.msra.mxu0 0.0
        %505 = vmatprep.subr.mxu0 0.0
        %506 = vmatpush1.msra.mxu0 0.0
        %507 = vmatprep.subr.mxu0 0.0
        %508 = vmatpush1.msra.mxu0 0.0
        %509 = vmatprep.subr.mxu0 0.0
        %510 = vmatpush1.msra.mxu0 0.0
        %511 = vmatprep.subr.mxu0 0.0
        %512 = vmatpush1.msra.mxu0 0.0
        %513 = vmatprep.subr.mxu0 0.0
        %514 = vmatpush1.msra.mxu0 0.0
        %515 = vmatprep.subr.mxu0 0.0
        %516 = vmatpush1.msra.mxu0 0.0
        %517 = vmatprep.subr.mxu0 0.0
        %518 = vmatpush1.msra.mxu0 0.0
        %519 = vmatprep.subr.mxu0 0.0
        %520 = vmatpush1.msra.mxu0 0.0
        %521 = vmatprep.subr.mxu0 0.0
        %522 = vmatpush1.msra.mxu0 0.0
        %523 = vmatprep.subr.mxu0 0.0
        %524 = vmatpush1.msra.mxu0 0.0
        %525 = vmatprep.subr.mxu0 0.0
        %526 = vmatpush1.msra.mxu0 0.0
        %527 = vmatprep.subr.mxu0 0.0
        %528 = vmatpush1.msra.mxu0 0.0
        %529 = vmatprep.subr.mxu0 0.0
        %530 = vmatpush1.msra.mxu0 0.0
        %531 = vmatprep.subr.mxu0 0.0
        %532 = vmatpush1.msra.mxu0 0.0
        %533 = vmatprep.subr.mxu0 0.0
        %534 = vmatpush1.msra.mxu0 0.0
        %535 = vmatprep.mubr.f32.mxu0 0.0
        %536 = vmatmul.mubr.f32.gmra.mrb[0].mxu0 %v455
        %v537 = vpop.f32.mrb[0].mxu0
        %v538 = vadd.f32 %v417, %v537
        %v539 = vpop.f32.mrb[0].mxu0
        %540 = vmatprep.mubr.f32.mxu0 0.0
        %541 = vmatmul.mubr.f32.gmra.mrb[0].mxu0 %v457
        %v542 = vpop.f32.mrb[0].mxu0
        %v543 = vadd.f32 %v422, %v542
        %v544 = vpop.f32.mrb[0].mxu0
        %545 = vmatprep.mubr.f32.mxu0 0.0
        %546 = vmatmul.mubr.f32.gmra.mrb[0].mxu0 %v459
        %v547 = vpop.f32.mrb[0].mxu0
        %v548 = vadd.f32 %v427, %v547
        %v549 = vpop.f32.mrb[0].mxu0
        %550 = vmatprep.mubr.f32.mxu0 0.0
        %551 = vmatmul.mubr.f32.gmra.mrb[0].mxu0 %v461
        %v552 = vpop.f32.mrb[0].mxu0
        %v553 = vadd.f32 %v432, %v552
        %v554 = vpop.f32.mrb[0].mxu0
        %555 = vmatprep.mubr.f32.mxu0 0.0
        %556 = vmatmul.mubr.f32.gmra.mrb[0].mxu0 %v463
        %v557 = vpop.f32.mrb[0].mxu0
        %v558 = vadd.f32 %v437, %v557
        %v559 = vpop.f32.mrb[0].mxu0
        %560 = vmatprep.mubr.f32.mxu0 0.0
        %561 = vmatmul.mubr.f32.gmra.mrb[0].mxu0 %v465
        %v562 = vpop.f32.mrb[0].mxu0
        %v563 = vadd.f32 %v442, %v562
        %v564 = vpop.f32.mrb[0].mxu0
        %565 = vmatprep.mubr.f32.mxu0 0.0
        %566 = vmatmul.mubr.f32.gmra.mrb[0].mxu0 %v467
        %v567 = vpop.f32.mrb[0].mxu0
        %v568 = vadd.f32 %v447, %v567
        %v569 = vpop.f32.mrb[0].mxu0
        %570 = vmatprep.mubr.f32.mxu0 0.0
        %571 = vmatmul.mubr.f32.gmra.mrb[0].mxu0 %v469
        %v572 = vpop.f32.mrb[0].mxu0
        %v573 = vadd.f32 %v452, %v572
        %v574 = vpop.f32.mrb[0].mxu0
        %575 = vdwg.mxu0
        %vm576 = vcmask 1043456
        %v577 = vrot.slane %v252, 4
        %v578 = vrot.slane %v253, 4
        %v579 = vsel %vm576, %v577, %v578
        %v580 = vrot.slane %v254, 4
        %v581 = vrot.slane %v255, 4
        %v582 = vsel %vm576, %v580, %v581
        %v583 = vrot.slane %v256, 4
        %v584 = vrot.slane %v257, 4
        %v585 = vsel %vm576, %v583, %v584
        %v586 = vrot.slane %v258, 4
        %v587 = vrot.slane %v259, 4
        %v588 = vsel %vm576, %v586, %v587
        %v589 = vrot.slane %v260, 4
        %v590 = vrot.slane %v261, 4
        %v591 = vsel %vm576, %v589, %v590
        %v592 = vrot.slane %v262, 4
        %v593 = vrot.slane %v263, 4
        %v594 = vsel %vm576, %v592, %v593
        %v595 = vrot.slane %v264, 4
        %v596 = vrot.slane %v265, 4
        %v597 = vsel %vm576, %v595, %v596
        %v598 = vrot.slane %v266, 4
        %v599 = vrot.slane %v267, 4
        %v600 = vsel %vm576, %v598, %v599
        %s601 = scalar_lea.vmem [#allocation3], 128
        %v602 = vld [vmem:[%s601] sm:$0xff]
        %v603 = vld [vmem:[%s601 + $0x8] sm:$0xff]
        %v604 = vld [vmem:[%s601 + $0x10] sm:$0xff]
        %v605 = vld [vmem:[%s601 + $0x18] sm:$0xff]
        %v606 = vld [vmem:[%s601 + $0x20] sm:$0xff]
        %v607 = vld [vmem:[%s601 + $0x28] sm:$0xff]
        %v608 = vld [vmem:[%s601 + $0x30] sm:$0xff]
        %v609 = vld [vmem:[%s601 + $0x38] sm:$0xff]
        %v610 = vsel %vm184, %v579, 0
        %v612 = vsel %vm184, %v582, 0
        %v614 = vsel %vm184, %v585, 0
        %v616 = vsel %vm184, %v588, 0
        %v618 = vsel %vm184, %v591, 0
        %v620 = vsel %vm184, %v594, 0
        %v622 = vsel %vm184, %v597, 0
        %v624 = vsel %vm184, %v600, 0
        %626 = vmatprep.subr.mxu0 0.0
        %627 = vmatpush1.msra.mxu0 %v602
        %628 = vmatprep.subr.mxu0 0.0
        %629 = vmatpush1.msra.mxu0 %v603
        %630 = vmatprep.subr.mxu0 0.0
        %631 = vmatpush1.msra.mxu0 %v604
        %632 = vmatprep.subr.mxu0 0.0
        %633 = vmatpush1.msra.mxu0 %v605
        %634 = vmatprep.subr.mxu0 0.0
        %635 = vmatpush1.msra.mxu0 %v606
        %636 = vmatprep.subr.mxu0 0.0
        %637 = vmatpush1.msra.mxu0 %v607
        %638 = vmatprep.subr.mxu0 0.0
        %639 = vmatpush1.msra.mxu0 %v608
        %640 = vmatprep.subr.mxu0 0.0
        %641 = vmatpush1.msra.mxu0 %v609
        %642 = vmatprep.subr.mxu0 0.0
        %643 = vmatpush1.msra.mxu0 0.0
        %644 = vmatprep.subr.mxu0 0.0
        %645 = vmatpush1.msra.mxu0 0.0
        %646 = vmatprep.subr.mxu0 0.0
        %647 = vmatpush1.msra.mxu0 0.0
        %648 = vmatprep.subr.mxu0 0.0
        %649 = vmatpush1.msra.mxu0 0.0
        %650 = vmatprep.subr.mxu0 0.0
        %651 = vmatpush1.msra.mxu0 0.0
        %652 = vmatprep.subr.mxu0 0.0
        %653 = vmatpush1.msra.mxu0 0.0
        %654 = vmatprep.subr.mxu0 0.0
        %655 = vmatpush1.msra.mxu0 0.0
        %656 = vmatprep.subr.mxu0 0.0
        %657 = vmatpush1.msra.mxu0 0.0
        %658 = vmatprep.subr.mxu0 0.0
        %659 = vmatpush1.msra.mxu0 0.0
        %660 = vmatprep.subr.mxu0 0.0
        %661 = vmatpush1.msra.mxu0 0.0
        %662 = vmatprep.subr.mxu0 0.0
        %663 = vmatpush1.msra.mxu0 0.0
        %664 = vmatprep.subr.mxu0 0.0
        %665 = vmatpush1.msra.mxu0 0.0
        %666 = vmatprep.subr.mxu0 0.0
        %667 = vmatpush1.msra.mxu0 0.0
        %668 = vmatprep.subr.mxu0 0.0
        %669 = vmatpush1.msra.mxu0 0.0
        %670 = vmatprep.subr.mxu0 0.0
        %671 = vmatpush1.msra.mxu0 0.0
        %672 = vmatprep.subr.mxu0 0.0
        %673 = vmatpush1.msra.mxu0 0.0
        %674 = vmatprep.subr.mxu0 0.0
        %675 = vmatpush1.msra.mxu0 0.0
        %676 = vmatprep.subr.mxu0 0.0
        %677 = vmatpush1.msra.mxu0 0.0
        %678 = vmatprep.subr.mxu0 0.0
        %679 = vmatpush1.msra.mxu0 0.0
        %680 = vmatprep.subr.mxu0 0.0
        %681 = vmatpush1.msra.mxu0 0.0
        %682 = vmatprep.subr.mxu0 0.0
        %683 = vmatpush1.msra.mxu0 0.0
        %684 = vmatprep.subr.mxu0 0.0
        %685 = vmatpush1.msra.mxu0 0.0
        %686 = vmatprep.subr.mxu0 0.0
        %687 = vmatpush1.msra.mxu0 0.0
        %688 = vmatprep.subr.mxu0 0.0
        %689 = vmatpush1.msra.mxu0 0.0
        %690 = vmatprep.mubr.f32.mxu0 0.0
        %691 = vmatmul.mubr.f32.gmra.mrb[0].mxu0 %v610
        %v692 = vpop.f32.mrb[0].mxu0
        %v693 = vadd.f32 0.0, %v692
        %v694 = vpop.f32.mrb[0].mxu0
        %695 = vmatprep.mubr.f32.mxu0 0.0
        %696 = vmatmul.mubr.f32.gmra.mrb[0].mxu0 %v612
        %v697 = vpop.f32.mrb[0].mxu0
        %v698 = vadd.f32 0.0, %v697
        %v699 = vpop.f32.mrb[0].mxu0
        %700 = vmatprep.mubr.f32.mxu0 0.0
        %701 = vmatmul.mubr.f32.gmra.mrb[0].mxu0 %v614
        %v702 = vpop.f32.mrb[0].mxu0
        %v703 = vadd.f32 0.0, %v702
        %v704 = vpop.f32.mrb[0].mxu0
        %705 = vmatprep.mubr.f32.mxu0 0.0
        %706 = vmatmul.mubr.f32.gmra.mrb[0].mxu0 %v616
        %v707 = vpop.f32.mrb[0].mxu0
        %v708 = vadd.f32 0.0, %v707
        %v709 = vpop.f32.mrb[0].mxu0
        %710 = vmatprep.mubr.f32.mxu0 0.0
        %711 = vmatmul.mubr.f32.gmra.mrb[0].mxu0 %v618
        %v712 = vpop.f32.mrb[0].mxu0
        %v713 = vadd.f32 0.0, %v712
        %v714 = vpop.f32.mrb[0].mxu0
        %715 = vmatprep.mubr.f32.mxu0 0.0
        %716 = vmatmul.mubr.f32.gmra.mrb[0].mxu0 %v620
        %v717 = vpop.f32.mrb[0].mxu0
        %v718 = vadd.f32 0.0, %v717
        %v719 = vpop.f32.mrb[0].mxu0
        %720 = vmatprep.mubr.f32.mxu0 0.0
        %721 = vmatmul.mubr.f32.gmra.mrb[0].mxu0 %v622
        %v722 = vpop.f32.mrb[0].mxu0
        %v723 = vadd.f32 0.0, %v722
        %v724 = vpop.f32.mrb[0].mxu0
        %725 = vmatprep.mubr.f32.mxu0 0.0
        %726 = vmatmul.mubr.f32.gmra.mrb[0].mxu0 %v624
        %v727 = vpop.f32.mrb[0].mxu0
        %v728 = vadd.f32 0.0, %v727
        %v729 = vpop.f32.mrb[0].mxu0
        %730 = vdwg.mxu0
        %v731 = vadd.f32 %v538, %v693
        %v732 = vadd.f32 %v543, %v698
        %v733 = vadd.f32 %v548, %v703
        %v734 = vadd.f32 %v553, %v708
        %v735 = vadd.f32 %v558, %v713
        %v736 = vadd.f32 %v563, %v718
        %v737 = vadd.f32 %v568, %v723
        %v738 = vadd.f32 %v573, %v728
        %s739 = scalar_lea.vmem [#allocation3], 192
        %v740 = vld [vmem:[%s739] sm:$0xff]
        %v741 = vld [vmem:[%s739 + $0x8] sm:$0xff]
        %v742 = vld [vmem:[%s739 + $0x10] sm:$0xff]
        %v743 = vld [vmem:[%s739 + $0x18] sm:$0xff]
        %v744 = vld [vmem:[%s739 + $0x20] sm:$0xff]
        %v745 = vld [vmem:[%s739 + $0x28] sm:$0xff]
        %v746 = vld [vmem:[%s739 + $0x30] sm:$0xff]
        %v747 = vld [vmem:[%s739 + $0x38] sm:$0xff]
        %v749 = vsel %vm184, %v268, 0
        %v752 = vsel %vm184, %v270, 0
        %754 = vmatprep.subr.mxu0 0.0
        %755 = vmatpush1.msra.mxu0 %v740
        %756 = vmatprep.subr.mxu0 0.0
        %757 = vmatpush1.msra.mxu0 %v741
        %758 = vmatprep.subr.mxu0 0.0
        %759 = vmatpush1.msra.mxu0 %v742
        %760 = vmatprep.subr.mxu0 0.0
        %761 = vmatpush1.msra.mxu0 %v743
        %762 = vmatprep.subr.mxu0 0.0
        %763 = vmatpush1.msra.mxu0 %v744
        %764 = vmatprep.subr.mxu0 0.0
        %765 = vmatpush1.msra.mxu0 %v745
        %766 = vmatprep.subr.mxu0 0.0
        %767 = vmatpush1.msra.mxu0 %v746
        %768 = vmatprep.subr.mxu0 0.0
        %769 = vmatpush1.msra.mxu0 %v747
        %770 = vmatprep.subr.mxu0 0.0
        %771 = vmatpush1.msra.mxu0 0.0
        %772 = vmatprep.subr.mxu0 0.0
        %773 = vmatpush1.msra.mxu0 0.0
        %774 = vmatprep.subr.mxu0 0.0
        %775 = vmatpush1.msra.mxu0 0.0
        %776 = vmatprep.subr.mxu0 0.0
        %777 = vmatpush1.msra.mxu0 0.0
        %778 = vmatprep.subr.mxu0 0.0
        %779 = vmatpush1.msra.mxu0 0.0
        %780 = vmatprep.subr.mxu0 0.0
        %781 = vmatpush1.msra.mxu0 0.0
        %782 = vmatprep.subr.mxu0 0.0
        %783 = vmatpush1.msra.mxu0 0.0
        %784 = vmatprep.subr.mxu0 0.0
        %785 = vmatpush1.msra.mxu0 0.0
        %786 = vmatprep.subr.mxu0 0.0
        %787 = vmatpush1.msra.mxu0 0.0
        %788 = vmatprep.subr.mxu0 0.0
        %789 = vmatpush1.msra.mxu0 0.0
        %790 = vmatprep.subr.mxu0 0.0
        %791 = vmatpush1.msra.mxu0 0.0
        %792 = vmatprep.subr.mxu0 0.0
        %793 = vmatpush1.msra.mxu0 0.0
        %794 = vmatprep.subr.mxu0 0.0
        %795 = vmatpush1.msra.mxu0 0.0
        %796 = vmatprep.subr.mxu0 0.0
        %797 = vmatpush1.msra.mxu0 0.0
        %798 = vmatprep.subr.mxu0 0.0
        %799 = vmatpush1.msra.mxu0 0.0
        %800 = vmatprep.subr.mxu0 0.0
        %801 = vmatpush1.msra.mxu0 0.0
        %802 = vmatprep.subr.mxu0 0.0
        %803 = vmatpush1.msra.mxu0 0.0
        %804 = vmatprep.subr.mxu0 0.0
        %805 = vmatpush1.msra.mxu0 0.0
        %806 = vmatprep.subr.mxu0 0.0
        %807 = vmatpush1.msra.mxu0 0.0
        %808 = vmatprep.subr.mxu0 0.0
        %809 = vmatpush1.msra.mxu0 0.0
        %810 = vmatprep.subr.mxu0 0.0
        %811 = vmatpush1.msra.mxu0 0.0
        %812 = vmatprep.subr.mxu0 0.0
        %813 = vmatpush1.msra.mxu0 0.0
        %814 = vmatprep.subr.mxu0 0.0
        %815 = vmatpush1.msra.mxu0 0.0
        %816 = vmatprep.subr.mxu0 0.0
        %817 = vmatpush1.msra.mxu0 0.0
        %818 = vmatprep.mubr.f32.mxu0 0.0
        %819 = vmatmul.mubr.f32.gmra.mrb[0].mxu0 %v459
        %v820 = vpop.f32.mrb[0].mxu0
        %v821 = vadd.f32 0.0, %v820
        %v822 = vpop.f32.mrb[0].mxu0
        %823 = vmatprep.mubr.f32.mxu0 0.0
        %824 = vmatmul.mubr.f32.gmra.mrb[0].mxu0 %v461
        %v825 = vpop.f32.mrb[0].mxu0
        %v826 = vadd.f32 0.0, %v825
        %v827 = vpop.f32.mrb[0].mxu0
        %828 = vmatprep.mubr.f32.mxu0 0.0
        %829 = vmatmul.mubr.f32.gmra.mrb[0].mxu0 %v463
        %v830 = vpop.f32.mrb[0].mxu0
        %v831 = vadd.f32 0.0, %v830
        %v832 = vpop.f32.mrb[0].mxu0
        %833 = vmatprep.mubr.f32.mxu0 0.0
        %834 = vmatmul.mubr.f32.gmra.mrb[0].mxu0 %v465
        %v835 = vpop.f32.mrb[0].mxu0
        %v836 = vadd.f32 0.0, %v835
        %v837 = vpop.f32.mrb[0].mxu0
        %838 = vmatprep.mubr.f32.mxu0 0.0
        %839 = vmatmul.mubr.f32.gmra.mrb[0].mxu0 %v467
        %v840 = vpop.f32.mrb[0].mxu0
        %v841 = vadd.f32 0.0, %v840
        %v842 = vpop.f32.mrb[0].mxu0
        %843 = vmatprep.mubr.f32.mxu0 0.0
        %844 = vmatmul.mubr.f32.gmra.mrb[0].mxu0 %v469
        %v845 = vpop.f32.mrb[0].mxu0
        %v846 = vadd.f32 0.0, %v845
        %v847 = vpop.f32.mrb[0].mxu0
        %848 = vmatprep.mubr.f32.mxu0 0.0
        %849 = vmatmul.mubr.f32.gmra.mrb[0].mxu0 %v749
        %v850 = vpop.f32.mrb[0].mxu0
        %v851 = vadd.f32 0.0, %v850
        %v852 = vpop.f32.mrb[0].mxu0
        %853 = vmatprep.mubr.f32.mxu0 0.0
        %854 = vmatmul.mubr.f32.gmra.mrb[0].mxu0 %v752
        %v855 = vpop.f32.mrb[0].mxu0
        %v856 = vadd.f32 0.0, %v855
        %v857 = vpop.f32.mrb[0].mxu0
        %858 = vdwg.mxu0
        %v859 = vadd.f32 %v731, %v821
        %v860 = vadd.f32 %v732, %v826
        %v861 = vadd.f32 %v733, %v831
        %v862 = vadd.f32 %v734, %v836
        %v863 = vadd.f32 %v735, %v841
        %v864 = vadd.f32 %v736, %v846
        %v865 = vadd.f32 %v737, %v851
        %v866 = vadd.f32 %v738, %v856
        %v869 = vrot.slane %v268, 2
        %v870 = vrot.slane %v269, 2
        %v871 = vsel %vm300, %v869, %v870
        %v872 = vrot.slane %v270, 2
        %v873 = vrot.slane %v271, 2
        %v874 = vsel %vm300, %v872, %v873
        %s875 = scalar_lea.vmem [#allocation3], 256
        %v876 = vld [vmem:[%s875] sm:$0xff]
        %v877 = vld [vmem:[%s875 + $0x8] sm:$0xff]
        %v878 = vld [vmem:[%s875 + $0x10] sm:$0xff]
        %v879 = vld [vmem:[%s875 + $0x18] sm:$0xff]
        %v880 = vld [vmem:[%s875 + $0x20] sm:$0xff]
        %v881 = vld [vmem:[%s875 + $0x28] sm:$0xff]
        %v882 = vld [vmem:[%s875 + $0x30] sm:$0xff]
        %v883 = vld [vmem:[%s875 + $0x38] sm:$0xff]
        %v884 = vsel %vm184, %v871, 0
        %v886 = vsel %vm184, %v874, 0
        %888 = vmatprep.subr.mxu0 0.0
        %889 = vmatpush1.msra.mxu0 %v876
        %890 = vmatprep.subr.mxu0 0.0
        %891 = vmatpush1.msra.mxu0 %v877
        %892 = vmatprep.subr.mxu0 0.0
        %893 = vmatpush1.msra.mxu0 %v878
        %894 = vmatprep.subr.mxu0 0.0
        %895 = vmatpush1.msra.mxu0 %v879
        %896 = vmatprep.subr.mxu0 0.0
        %897 = vmatpush1.msra.mxu0 %v880
        %898 = vmatprep.subr.mxu0 0.0
        %899 = vmatpush1.msra.mxu0 %v881
        %900 = vmatprep.subr.mxu0 0.0
        %901 = vmatpush1.msra.mxu0 %v882
        %902 = vmatprep.subr.mxu0 0.0
        %903 = vmatpush1.msra.mxu0 %v883
        %904 = vmatprep.subr.mxu0 0.0
        %905 = vmatpush1.msra.mxu0 0.0
        %906 = vmatprep.subr.mxu0 0.0
        %907 = vmatpush1.msra.mxu0 0.0
        %908 = vmatprep.subr.mxu0 0.0
        %909 = vmatpush1.msra.mxu0 0.0
        %910 = vmatprep.subr.mxu0 0.0
        %911 = vmatpush1.msra.mxu0 0.0
        %912 = vmatprep.subr.mxu0 0.0
        %913 = vmatpush1.msra.mxu0 0.0
        %914 = vmatprep.subr.mxu0 0.0
        %915 = vmatpush1.msra.mxu0 0.0
        %916 = vmatprep.subr.mxu0 0.0
        %917 = vmatpush1.msra.mxu0 0.0
        %918 = vmatprep.subr.mxu0 0.0
        %919 = vmatpush1.msra.mxu0 0.0
        %920 = vmatprep.subr.mxu0 0.0
        %921 = vmatpush1.msra.mxu0 0.0
        %922 = vmatprep.subr.mxu0 0.0
        %923 = vmatpush1.msra.mxu0 0.0
        %924 = vmatprep.subr.mxu0 0.0
        %925 = vmatpush1.msra.mxu0 0.0
        %926 = vmatprep.subr.mxu0 0.0
        %927 = vmatpush1.msra.mxu0 0.0
        %928 = vmatprep.subr.mxu0 0.0
        %929 = vmatpush1.msra.mxu0 0.0
        %930 = vmatprep.subr.mxu0 0.0
        %931 = vmatpush1.msra.mxu0 0.0
        %932 = vmatprep.subr.mxu0 0.0
        %933 = vmatpush1.msra.mxu0 0.0
        %934 = vmatprep.subr.mxu0 0.0
        %935 = vmatpush1.msra.mxu0 0.0
        %936 = vmatprep.subr.mxu0 0.0
        %937 = vmatpush1.msra.mxu0 0.0
        %938 = vmatprep.subr.mxu0 0.0
        %939 = vmatpush1.msra.mxu0 0.0
        %940 = vmatprep.subr.mxu0 0.0
        %941 = vmatpush1.msra.mxu0 0.0
        %942 = vmatprep.subr.mxu0 0.0
        %943 = vmatpush1.msra.mxu0 0.0
        %944 = vmatprep.subr.mxu0 0.0
        %945 = vmatpush1.msra.mxu0 0.0
        %946 = vmatprep.subr.mxu0 0.0
        %947 = vmatpush1.msra.mxu0 0.0
        %948 = vmatprep.subr.mxu0 0.0
        %949 = vmatpush1.msra.mxu0 0.0
        %950 = vmatprep.subr.mxu0 0.0
        %951 = vmatpush1.msra.mxu0 0.0
        %952 = vmatprep.mubr.f32.mxu0 0.0
        %953 = vmatmul.mubr.f32.gmra.mrb[0].mxu0 %v338
        %v954 = vpop.f32.mrb[0].mxu0
        %v955 = vadd.f32 0.0, %v954
        %v956 = vpop.f32.mrb[0].mxu0
        %957 = vmatprep.mubr.f32.mxu0 0.0
        %958 = vmatmul.mubr.f32.gmra.mrb[0].mxu0 %v340
        %v959 = vpop.f32.mrb[0].mxu0
        %v960 = vadd.f32 0.0, %v959
        %v961 = vpop.f32.mrb[0].mxu0
        %962 = vmatprep.mubr.f32.mxu0 0.0
        %963 = vmatmul.mubr.f32.gmra.mrb[0].mxu0 %v342
        %v964 = vpop.f32.mrb[0].mxu0
        %v965 = vadd.f32 0.0, %v964
        %v966 = vpop.f32.mrb[0].mxu0
        %967 = vmatprep.mubr.f32.mxu0 0.0
        %968 = vmatmul.mubr.f32.gmra.mrb[0].mxu0 %v344
        %v969 = vpop.f32.mrb[0].mxu0
        %v970 = vadd.f32 0.0, %v969
        %v971 = vpop.f32.mrb[0].mxu0
        %972 = vmatprep.mubr.f32.mxu0 0.0
        %973 = vmatmul.mubr.f32.gmra.mrb[0].mxu0 %v346
        %v974 = vpop.f32.mrb[0].mxu0
        %v975 = vadd.f32 0.0, %v974
        %v976 = vpop.f32.mrb[0].mxu0
        %977 = vmatprep.mubr.f32.mxu0 0.0
        %978 = vmatmul.mubr.f32.gmra.mrb[0].mxu0 %v348
        %v979 = vpop.f32.mrb[0].mxu0
        %v980 = vadd.f32 0.0, %v979
        %v981 = vpop.f32.mrb[0].mxu0
        %982 = vmatprep.mubr.f32.mxu0 0.0
        %983 = vmatmul.mubr.f32.gmra.mrb[0].mxu0 %v884
        %v984 = vpop.f32.mrb[0].mxu0
        %v985 = vadd.f32 0.0, %v984
        %v986 = vpop.f32.mrb[0].mxu0
        %987 = vmatprep.mubr.f32.mxu0 0.0
        %988 = vmatmul.mubr.f32.gmra.mrb[0].mxu0 %v886
        %v989 = vpop.f32.mrb[0].mxu0
        %v990 = vadd.f32 0.0, %v989
        %v991 = vpop.f32.mrb[0].mxu0
        %992 = vdwg.mxu0
        %v993 = vadd.f32 %v859, %v955
        %v994 = vadd.f32 %v860, %v960
        %v995 = vadd.f32 %v861, %v965
        %v996 = vadd.f32 %v862, %v970
        %v997 = vadd.f32 %v863, %v975
        %v998 = vadd.f32 %v864, %v980
        %v999 = vadd.f32 %v865, %v985
        %v1000 = vadd.f32 %v866, %v990
        %v1001 = vrot.slane %v268, 4
        %v1002 = vrot.slane %v269, 4
        %v1003 = vsel %vm576, %v1001, %v1002
        %v1004 = vrot.slane %v270, 4
        %v1005 = vrot.slane %v271, 4
        %v1006 = vsel %vm576, %v1004, %v1005
        %s1007 = scalar_lea.vmem [#allocation3], 320
        %v1008 = vld [vmem:[%s1007] sm:$0xff]
        %v1009 = vld [vmem:[%s1007 + $0x8] sm:$0xff]
        %v1010 = vld [vmem:[%s1007 + $0x10] sm:$0xff]
        %v1011 = vld [vmem:[%s1007 + $0x18] sm:$0xff]
        %v1012 = vld [vmem:[%s1007 + $0x20] sm:$0xff]
        %v1013 = vld [vmem:[%s1007 + $0x28] sm:$0xff]
        %v1014 = vld [vmem:[%s1007 + $0x30] sm:$0xff]
        %v1015 = vld [vmem:[%s1007 + $0x38] sm:$0xff]
        %v1016 = vsel %vm184, %v1003, 0
        %v1018 = vsel %vm184, %v1006, 0
        %1020 = vmatprep.subr.mxu0 0.0
        %1021 = vmatpush1.msra.mxu0 %v1008
        %1022 = vmatprep.subr.mxu0 0.0
        %1023 = vmatpush1.msra.mxu0 %v1009
        %1024 = vmatprep.subr.mxu0 0.0
        %1025 = vmatpush1.msra.mxu0 %v1010
        %1026 = vmatprep.subr.mxu0 0.0
        %1027 = vmatpush1.msra.mxu0 %v1011
        %1028 = vmatprep.subr.mxu0 0.0
        %1029 = vmatpush1.msra.mxu0 %v1012
        %1030 = vmatprep.subr.mxu0 0.0
        %1031 = vmatpush1.msra.mxu0 %v1013
        %1032 = vmatprep.subr.mxu0 0.0
        %1033 = vmatpush1.msra.mxu0 %v1014
        %1034 = vmatprep.subr.mxu0 0.0
        %1035 = vmatpush1.msra.mxu0 %v1015
        %1036 = vmatprep.subr.mxu0 0.0
        %1037 = vmatpush1.msra.mxu0 0.0
        %1038 = vmatprep.subr.mxu0 0.0
        %1039 = vmatpush1.msra.mxu0 0.0
        %1040 = vmatprep.subr.mxu0 0.0
        %1041 = vmatpush1.msra.mxu0 0.0
        %1042 = vmatprep.subr.mxu0 0.0
        %1043 = vmatpush1.msra.mxu0 0.0
        %1044 = vmatprep.subr.mxu0 0.0
        %1045 = vmatpush1.msra.mxu0 0.0
        %1046 = vmatprep.subr.mxu0 0.0
        %1047 = vmatpush1.msra.mxu0 0.0
        %1048 = vmatprep.subr.mxu0 0.0
        %1049 = vmatpush1.msra.mxu0 0.0
        %1050 = vmatprep.subr.mxu0 0.0
        %1051 = vmatpush1.msra.mxu0 0.0
        %1052 = vmatprep.subr.mxu0 0.0
        %1053 = vmatpush1.msra.mxu0 0.0
        %1054 = vmatprep.subr.mxu0 0.0
        %1055 = vmatpush1.msra.mxu0 0.0
        %1056 = vmatprep.subr.mxu0 0.0
        %1057 = vmatpush1.msra.mxu0 0.0
        %1058 = vmatprep.subr.mxu0 0.0
        %1059 = vmatpush1.msra.mxu0 0.0
        %1060 = vmatprep.subr.mxu0 0.0
        %1061 = vmatpush1.msra.mxu0 0.0
        %1062 = vmatprep.subr.mxu0 0.0
        %1063 = vmatpush1.msra.mxu0 0.0
        %1064 = vmatprep.subr.mxu0 0.0
        %1065 = vmatpush1.msra.mxu0 0.0
        %1066 = vmatprep.subr.mxu0 0.0
        %1067 = vmatpush1.msra.mxu0 0.0
        %1068 = vmatprep.subr.mxu0 0.0
        %1069 = vmatpush1.msra.mxu0 0.0
        %1070 = vmatprep.subr.mxu0 0.0
        %1071 = vmatpush1.msra.mxu0 0.0
        %1072 = vmatprep.subr.mxu0 0.0
        %1073 = vmatpush1.msra.mxu0 0.0
        %1074 = vmatprep.subr.mxu0 0.0
        %1075 = vmatpush1.msra.mxu0 0.0
        %1076 = vmatprep.subr.mxu0 0.0
        %1077 = vmatpush1.msra.mxu0 0.0
        %1078 = vmatprep.subr.mxu0 0.0
        %1079 = vmatpush1.msra.mxu0 0.0
        %1080 = vmatprep.subr.mxu0 0.0
        %1081 = vmatpush1.msra.mxu0 0.0
        %1082 = vmatprep.subr.mxu0 0.0
        %1083 = vmatpush1.msra.mxu0 0.0
        %1084 = vmatprep.mubr.f32.mxu0 0.0
        %1085 = vmatmul.mubr.f32.gmra.mrb[0].mxu0 %v614
        %v1086 = vpop.f32.mrb[0].mxu0
        %v1087 = vadd.f32 0.0, %v1086
        %v1088 = vpop.f32.mrb[0].mxu0
        %1089 = vmatprep.mubr.f32.mxu0 0.0
        %1090 = vmatmul.mubr.f32.gmra.mrb[0].mxu0 %v616
        %v1091 = vpop.f32.mrb[0].mxu0
        %v1092 = vadd.f32 0.0, %v1091
        %v1093 = vpop.f32.mrb[0].mxu0
        %1094 = vmatprep.mubr.f32.mxu0 0.0
        %1095 = vmatmul.mubr.f32.gmra.mrb[0].mxu0 %v618
        %v1096 = vpop.f32.mrb[0].mxu0
        %v1097 = vadd.f32 0.0, %v1096
        %v1098 = vpop.f32.mrb[0].mxu0
        %1099 = vmatprep.mubr.f32.mxu0 0.0
        %1100 = vmatmul.mubr.f32.gmra.mrb[0].mxu0 %v620
        %v1101 = vpop.f32.mrb[0].mxu0
        %v1102 = vadd.f32 0.0, %v1101
        %v1103 = vpop.f32.mrb[0].mxu0
        %1104 = vmatprep.mubr.f32.mxu0 0.0
        %1105 = vmatmul.mubr.f32.gmra.mrb[0].mxu0 %v622
        %v1106 = vpop.f32.mrb[0].mxu0
        %v1107 = vadd.f32 0.0, %v1106
        %v1108 = vpop.f32.mrb[0].mxu0
        %1109 = vmatprep.mubr.f32.mxu0 0.0
        %1110 = vmatmul.mubr.f32.gmra.mrb[0].mxu0 %v624
        %v1111 = vpop.f32.mrb[0].mxu0
        %v1112 = vadd.f32 0.0, %v1111
        %v1113 = vpop.f32.mrb[0].mxu0
        %1114 = vmatprep.mubr.f32.mxu0 0.0
        %1115 = vmatmul.mubr.f32.gmra.mrb[0].mxu0 %v1016
        %v1116 = vpop.f32.mrb[0].mxu0
        %v1117 = vadd.f32 0.0, %v1116
        %v1118 = vpop.f32.mrb[0].mxu0
        %1119 = vmatprep.mubr.f32.mxu0 0.0
        %1120 = vmatmul.mubr.f32.gmra.mrb[0].mxu0 %v1018
        %v1121 = vpop.f32.mrb[0].mxu0
        %v1122 = vadd.f32 0.0, %v1121
        %v1123 = vpop.f32.mrb[0].mxu0
        %1124 = vdwg.mxu0
        %v1125 = vadd.f32 %v993, %v1087
        %v1126 = vadd.f32 %v994, %v1092
        %v1127 = vadd.f32 %v995, %v1097
        %v1128 = vadd.f32 %v996, %v1102
        %v1129 = vadd.f32 %v997, %v1107
        %v1130 = vadd.f32 %v998, %v1112
        %v1131 = vadd.f32 %v999, %v1117
        %v1132 = vadd.f32 %v1000, %v1122
        %s1133 = scalar_lea.vmem [#allocation3], 384
        %v1134 = vld [vmem:[%s1133] sm:$0xff]
        %v1135 = vld [vmem:[%s1133 + $0x8] sm:$0xff]
        %v1136 = vld [vmem:[%s1133 + $0x10] sm:$0xff]
        %v1137 = vld [vmem:[%s1133 + $0x18] sm:$0xff]
        %v1138 = vld [vmem:[%s1133 + $0x20] sm:$0xff]
        %v1139 = vld [vmem:[%s1133 + $0x28] sm:$0xff]
        %v1140 = vld [vmem:[%s1133 + $0x30] sm:$0xff]
        %v1141 = vld [vmem:[%s1133 + $0x38] sm:$0xff]
        %v1143 = vsel %vm184, %v272, 0
        %v1146 = vsel %vm184, %v274, 0
        %1148 = vmatprep.subr.mxu0 0.0
        %1149 = vmatpush1.msra.mxu0 %v1134
        %1150 = vmatprep.subr.mxu0 0.0
        %1151 = vmatpush1.msra.mxu0 %v1135
        %1152 = vmatprep.subr.mxu0 0.0
        %1153 = vmatpush1.msra.mxu0 %v1136
        %1154 = vmatprep.subr.mxu0 0.0
        %1155 = vmatpush1.msra.mxu0 %v1137
        %1156 = vmatprep.subr.mxu0 0.0
        %1157 = vmatpush1.msra.mxu0 %v1138
        %1158 = vmatprep.subr.mxu0 0.0
        %1159 = vmatpush1.msra.mxu0 %v1139
        %1160 = vmatprep.subr.mxu0 0.0
        %1161 = vmatpush1.msra.mxu0 %v1140
        %1162 = vmatprep.subr.mxu0 0.0
        %1163 = vmatpush1.msra.mxu0 %v1141
        %1164 = vmatprep.subr.mxu0 0.0
        %1165 = vmatpush1.msra.mxu0 0.0
        %1166 = vmatprep.subr.mxu0 0.0
        %1167 = vmatpush1.msra.mxu0 0.0
        %1168 = vmatprep.subr.mxu0 0.0
        %1169 = vmatpush1.msra.mxu0 0.0
        %1170 = vmatprep.subr.mxu0 0.0
        %1171 = vmatpush1.msra.mxu0 0.0
        %1172 = vmatprep.subr.mxu0 0.0
        %1173 = vmatpush1.msra.mxu0 0.0
        %1174 = vmatprep.subr.mxu0 0.0
        %1175 = vmatpush1.msra.mxu0 0.0
        %1176 = vmatprep.subr.mxu0 0.0
        %1177 = vmatpush1.msra.mxu0 0.0
        %1178 = vmatprep.subr.mxu0 0.0
        %1179 = vmatpush1.msra.mxu0 0.0
        %1180 = vmatprep.subr.mxu0 0.0
        %1181 = vmatpush1.msra.mxu0 0.0
        %1182 = vmatprep.subr.mxu0 0.0
        %1183 = vmatpush1.msra.mxu0 0.0
        %1184 = vmatprep.subr.mxu0 0.0
        %1185 = vmatpush1.msra.mxu0 0.0
        %1186 = vmatprep.subr.mxu0 0.0
        %1187 = vmatpush1.msra.mxu0 0.0
        %1188 = vmatprep.subr.mxu0 0.0
        %1189 = vmatpush1.msra.mxu0 0.0
        %1190 = vmatprep.subr.mxu0 0.0
        %1191 = vmatpush1.msra.mxu0 0.0
        %1192 = vmatprep.subr.mxu0 0.0
        %1193 = vmatpush1.msra.mxu0 0.0
        %1194 = vmatprep.subr.mxu0 0.0
        %1195 = vmatpush1.msra.mxu0 0.0
        %1196 = vmatprep.subr.mxu0 0.0
        %1197 = vmatpush1.msra.mxu0 0.0
        %1198 = vmatprep.subr.mxu0 0.0
        %1199 = vmatpush1.msra.mxu0 0.0
        %1200 = vmatprep.subr.mxu0 0.0
        %1201 = vmatpush1.msra.mxu0 0.0
        %1202 = vmatprep.subr.mxu0 0.0
        %1203 = vmatpush1.msra.mxu0 0.0
        %1204 = vmatprep.subr.mxu0 0.0
        %1205 = vmatpush1.msra.mxu0 0.0
        %1206 = vmatprep.subr.mxu0 0.0
        %1207 = vmatpush1.msra.mxu0 0.0
        %1208 = vmatprep.subr.mxu0 0.0
        %1209 = vmatpush1.msra.mxu0 0.0
        %1210 = vmatprep.subr.mxu0 0.0
        %1211 = vmatpush1.msra.mxu0 0.0
        %1212 = vmatprep.mubr.f32.mxu0 0.0
        %1213 = vmatmul.mubr.f32.gmra.mrb[0].mxu0 %v463
        %v1214 = vpop.f32.mrb[0].mxu0
        %v1215 = vadd.f32 0.0, %v1214
        %v1216 = vpop.f32.mrb[0].mxu0
        %1217 = vmatprep.mubr.f32.mxu0 0.0
        %1218 = vmatmul.mubr.f32.gmra.mrb[0].mxu0 %v465
        %v1219 = vpop.f32.mrb[0].mxu0
        %v1220 = vadd.f32 0.0, %v1219
        %v1221 = vpop.f32.mrb[0].mxu0
        %1222 = vmatprep.mubr.f32.mxu0 0.0
        %1223 = vmatmul.mubr.f32.gmra.mrb[0].mxu0 %v467
        %v1224 = vpop.f32.mrb[0].mxu0
        %v1225 = vadd.f32 0.0, %v1224
        %v1226 = vpop.f32.mrb[0].mxu0
        %1227 = vmatprep.mubr.f32.mxu0 0.0
        %1228 = vmatmul.mubr.f32.gmra.mrb[0].mxu0 %v469
        %v1229 = vpop.f32.mrb[0].mxu0
        %v1230 = vadd.f32 0.0, %v1229
        %v1231 = vpop.f32.mrb[0].mxu0
        %1232 = vmatprep.mubr.f32.mxu0 0.0
        %1233 = vmatmul.mubr.f32.gmra.mrb[0].mxu0 %v749
        %v1234 = vpop.f32.mrb[0].mxu0
        %v1235 = vadd.f32 0.0, %v1234
        %v1236 = vpop.f32.mrb[0].mxu0
        %1237 = vmatprep.mubr.f32.mxu0 0.0
        %1238 = vmatmul.mubr.f32.gmra.mrb[0].mxu0 %v752
        %v1239 = vpop.f32.mrb[0].mxu0
        %v1240 = vadd.f32 0.0, %v1239
        %v1241 = vpop.f32.mrb[0].mxu0
        %1242 = vmatprep.mubr.f32.mxu0 0.0
        %1243 = vmatmul.mubr.f32.gmra.mrb[0].mxu0 %v1143
        %v1244 = vpop.f32.mrb[0].mxu0
        %v1245 = vadd.f32 0.0, %v1244
        %v1246 = vpop.f32.mrb[0].mxu0
        %1247 = vmatprep.mubr.f32.mxu0 0.0
        %1248 = vmatmul.mubr.f32.gmra.mrb[0].mxu0 %v1146
        %v1249 = vpop.f32.mrb[0].mxu0
        %v1250 = vadd.f32 0.0, %v1249
        %v1251 = vpop.f32.mrb[0].mxu0
        %1252 = vdwg.mxu0
        %v1253 = vadd.f32 %v1125, %v1215
        %v1254 = vadd.f32 %v1126, %v1220
        %v1255 = vadd.f32 %v1127, %v1225
        %v1256 = vadd.f32 %v1128, %v1230
        %v1257 = vadd.f32 %v1129, %v1235
        %v1258 = vadd.f32 %v1130, %v1240
        %v1259 = vadd.f32 %v1131, %v1245
        %v1260 = vadd.f32 %v1132, %v1250
        %v1263 = vrot.slane %v272, 2
        %v1264 = vrot.slane %v273, 2
        %v1265 = vsel %vm300, %v1263, %v1264
        %v1266 = vrot.slane %v274, 2
        %v1267 = vrot.slane %v275, 2
        %v1268 = vsel %vm300, %v1266, %v1267
        %s1269 = scalar_lea.vmem [#allocation3], 448
        %v1270 = vld [vmem:[%s1269] sm:$0xff]
        %v1271 = vld [vmem:[%s1269 + $0x8] sm:$0xff]
        %v1272 = vld [vmem:[%s1269 + $0x10] sm:$0xff]
        %v1273 = vld [vmem:[%s1269 + $0x18] sm:$0xff]
        %v1274 = vld [vmem:[%s1269 + $0x20] sm:$0xff]
        %v1275 = vld [vmem:[%s1269 + $0x28] sm:$0xff]
        %v1276 = vld [vmem:[%s1269 + $0x30] sm:$0xff]
        %v1277 = vld [vmem:[%s1269 + $0x38] sm:$0xff]
        %v1278 = vsel %vm184, %v1265, 0
        %v1280 = vsel %vm184, %v1268, 0
        %1282 = vmatprep.subr.mxu0 0.0
        %1283 = vmatpush1.msra.mxu0 %v1270
        %1284 = vmatprep.subr.mxu0 0.0
        %1285 = vmatpush1.msra.mxu0 %v1271
        %1286 = vmatprep.subr.mxu0 0.0
        %1287 = vmatpush1.msra.mxu0 %v1272
        %1288 = vmatprep.subr.mxu0 0.0
        %1289 = vmatpush1.msra.mxu0 %v1273
        %1290 = vmatprep.subr.mxu0 0.0
        %1291 = vmatpush1.msra.mxu0 %v1274
        %1292 = vmatprep.subr.mxu0 0.0
        %1293 = vmatpush1.msra.mxu0 %v1275
        %1294 = vmatprep.subr.mxu0 0.0
        %1295 = vmatpush1.msra.mxu0 %v1276
        %1296 = vmatprep.subr.mxu0 0.0
        %1297 = vmatpush1.msra.mxu0 %v1277
        %1298 = vmatprep.subr.mxu0 0.0
        %1299 = vmatpush1.msra.mxu0 0.0
        %1300 = vmatprep.subr.mxu0 0.0
        %1301 = vmatpush1.msra.mxu0 0.0
        %1302 = vmatprep.subr.mxu0 0.0
        %1303 = vmatpush1.msra.mxu0 0.0
        %1304 = vmatprep.subr.mxu0 0.0
        %1305 = vmatpush1.msra.mxu0 0.0
        %1306 = vmatprep.subr.mxu0 0.0
        %1307 = vmatpush1.msra.mxu0 0.0
        %1308 = vmatprep.subr.mxu0 0.0
        %1309 = vmatpush1.msra.mxu0 0.0
        %1310 = vmatprep.subr.mxu0 0.0
        %1311 = vmatpush1.msra.mxu0 0.0
        %1312 = vmatprep.subr.mxu0 0.0
        %1313 = vmatpush1.msra.mxu0 0.0
        %1314 = vmatprep.subr.mxu0 0.0
        %1315 = vmatpush1.msra.mxu0 0.0
        %1316 = vmatprep.subr.mxu0 0.0
        %1317 = vmatpush1.msra.mxu0 0.0
        %1318 = vmatprep.subr.mxu0 0.0
        %1319 = vmatpush1.msra.mxu0 0.0
        %1320 = vmatprep.subr.mxu0 0.0
        %1321 = vmatpush1.msra.mxu0 0.0
        %1322 = vmatprep.subr.mxu0 0.0
        %1323 = vmatpush1.msra.mxu0 0.0
        %1324 = vmatprep.subr.mxu0 0.0
        %1325 = vmatpush1.msra.mxu0 0.0
        %1326 = vmatprep.subr.mxu0 0.0
        %1327 = vmatpush1.msra.mxu0 0.0
        %1328 = vmatprep.subr.mxu0 0.0
        %1329 = vmatpush1.msra.mxu0 0.0
        %1330 = vmatprep.subr.mxu0 0.0
        %1331 = vmatpush1.msra.mxu0 0.0
        %1332 = vmatprep.subr.mxu0 0.0
        %1333 = vmatpush1.msra.mxu0 0.0
        %1334 = vmatprep.subr.mxu0 0.0
        %1335 = vmatpush1.msra.mxu0 0.0
        %1336 = vmatprep.subr.mxu0 0.0
        %1337 = vmatpush1.msra.mxu0 0.0
        %1338 = vmatprep.subr.mxu0 0.0
        %1339 = vmatpush1.msra.mxu0 0.0
        %1340 = vmatprep.subr.mxu0 0.0
        %1341 = vmatpush1.msra.mxu0 0.0
        %1342 = vmatprep.subr.mxu0 0.0
        %1343 = vmatpush1.msra.mxu0 0.0
        %1344 = vmatprep.subr.mxu0 0.0
        %1345 = vmatpush1.msra.mxu0 0.0
        %1346 = vmatprep.mubr.f32.mxu0 0.0
        %1347 = vmatmul.mubr.f32.gmra.mrb[0].mxu0 %v342
        %v1348 = vpop.f32.mrb[0].mxu0
        %v1349 = vadd.f32 0.0, %v1348
        %v1350 = vpop.f32.mrb[0].mxu0
        %1351 = vmatprep.mubr.f32.mxu0 0.0
        %1352 = vmatmul.mubr.f32.gmra.mrb[0].mxu0 %v344
        %v1353 = vpop.f32.mrb[0].mxu0
        %v1354 = vadd.f32 0.0, %v1353
        %v1355 = vpop.f32.mrb[0].mxu0
        %1356 = vmatprep.mubr.f32.mxu0 0.0
        %1357 = vmatmul.mubr.f32.gmra.mrb[0].mxu0 %v346
        %v1358 = vpop.f32.mrb[0].mxu0
        %v1359 = vadd.f32 0.0, %v1358
        %v1360 = vpop.f32.mrb[0].mxu0
        %1361 = vmatprep.mubr.f32.mxu0 0.0
        %1362 = vmatmul.mubr.f32.gmra.mrb[0].mxu0 %v348
        %v1363 = vpop.f32.mrb[0].mxu0
        %v1364 = vadd.f32 0.0, %v1363
        %v1365 = vpop.f32.mrb[0].mxu0
        %1366 = vmatprep.mubr.f32.mxu0 0.0
        %1367 = vmatmul.mubr.f32.gmra.mrb[0].mxu0 %v884
        %v1368 = vpop.f32.mrb[0].mxu0
        %v1369 = vadd.f32 0.0, %v1368
        %v1370 = vpop.f32.mrb[0].mxu0
        %1371 = vmatprep.mubr.f32.mxu0 0.0
        %1372 = vmatmul.mubr.f32.gmra.mrb[0].mxu0 %v886
        %v1373 = vpop.f32.mrb[0].mxu0
        %v1374 = vadd.f32 0.0, %v1373
        %v1375 = vpop.f32.mrb[0].mxu0
        %1376 = vmatprep.mubr.f32.mxu0 0.0
        %1377 = vmatmul.mubr.f32.gmra.mrb[0].mxu0 %v1278
        %v1378 = vpop.f32.mrb[0].mxu0
        %v1379 = vadd.f32 0.0, %v1378
        %v1380 = vpop.f32.mrb[0].mxu0
        %1381 = vmatprep.mubr.f32.mxu0 0.0
        %1382 = vmatmul.mubr.f32.gmra.mrb[0].mxu0 %v1280
        %v1383 = vpop.f32.mrb[0].mxu0
        %v1384 = vadd.f32 0.0, %v1383
        %v1385 = vpop.f32.mrb[0].mxu0
        %1386 = vdwg.mxu0
        %v1387 = vadd.f32 %v1253, %v1349
        %v1388 = vadd.f32 %v1254, %v1354
        %v1389 = vadd.f32 %v1255, %v1359
        %v1390 = vadd.f32 %v1256, %v1364
        %v1391 = vadd.f32 %v1257, %v1369
        %v1392 = vadd.f32 %v1258, %v1374
        %v1393 = vadd.f32 %v1259, %v1379
        %v1394 = vadd.f32 %v1260, %v1384
        %v1395 = vrot.slane %v272, 4
        %v1396 = vrot.slane %v273, 4
        %v1397 = vsel %vm576, %v1395, %v1396
        %v1398 = vrot.slane %v274, 4
        %v1399 = vrot.slane %v275, 4
        %v1400 = vsel %vm576, %v1398, %v1399
        %s1401 = scalar_lea.vmem [#allocation3], 512
        %v1402 = vld [vmem:[%s1401] sm:$0xff]
        %v1403 = vld [vmem:[%s1401 + $0x8] sm:$0xff]
        %v1404 = vld [vmem:[%s1401 + $0x10] sm:$0xff]
        %v1405 = vld [vmem:[%s1401 + $0x18] sm:$0xff]
        %v1406 = vld [vmem:[%s1401 + $0x20] sm:$0xff]
        %v1407 = vld [vmem:[%s1401 + $0x28] sm:$0xff]
        %v1408 = vld [vmem:[%s1401 + $0x30] sm:$0xff]
        %v1409 = vld [vmem:[%s1401 + $0x38] sm:$0xff]
        %v1410 = vsel %vm184, %v1397, 0
        %v1412 = vsel %vm184, %v1400, 0
        %1414 = vmatprep.subr.mxu0 0.0
        %1415 = vmatpush1.msra.mxu0 %v1402
        %1416 = vmatprep.subr.mxu0 0.0
        %1417 = vmatpush1.msra.mxu0 %v1403
        %1418 = vmatprep.subr.mxu0 0.0
        %1419 = vmatpush1.msra.mxu0 %v1404
        %1420 = vmatprep.subr.mxu0 0.0
        %1421 = vmatpush1.msra.mxu0 %v1405
        %1422 = vmatprep.subr.mxu0 0.0
        %1423 = vmatpush1.msra.mxu0 %v1406
        %1424 = vmatprep.subr.mxu0 0.0
        %1425 = vmatpush1.msra.mxu0 %v1407
        %1426 = vmatprep.subr.mxu0 0.0
        %1427 = vmatpush1.msra.mxu0 %v1408
        %1428 = vmatprep.subr.mxu0 0.0
        %1429 = vmatpush1.msra.mxu0 %v1409
        %1430 = vmatprep.subr.mxu0 0.0
        %1431 = vmatpush1.msra.mxu0 0.0
        %1432 = vmatprep.subr.mxu0 0.0
        %1433 = vmatpush1.msra.mxu0 0.0
        %1434 = vmatprep.subr.mxu0 0.0
        %1435 = vmatpush1.msra.mxu0 0.0
        %1436 = vmatprep.subr.mxu0 0.0
        %1437 = vmatpush1.msra.mxu0 0.0
        %1438 = vmatprep.subr.mxu0 0.0
        %1439 = vmatpush1.msra.mxu0 0.0
        %1440 = vmatprep.subr.mxu0 0.0
        %1441 = vmatpush1.msra.mxu0 0.0
        %1442 = vmatprep.subr.mxu0 0.0
        %1443 = vmatpush1.msra.mxu0 0.0
        %1444 = vmatprep.subr.mxu0 0.0
        %1445 = vmatpush1.msra.mxu0 0.0
        %1446 = vmatprep.subr.mxu0 0.0
        %1447 = vmatpush1.msra.mxu0 0.0
        %1448 = vmatprep.subr.mxu0 0.0
        %1449 = vmatpush1.msra.mxu0 0.0
        %1450 = vmatprep.subr.mxu0 0.0
        %1451 = vmatpush1.msra.mxu0 0.0
        %1452 = vmatprep.subr.mxu0 0.0
        %1453 = vmatpush1.msra.mxu0 0.0
        %1454 = vmatprep.subr.mxu0 0.0
        %1455 = vmatpush1.msra.mxu0 0.0
        %1456 = vmatprep.subr.mxu0 0.0
        %1457 = vmatpush1.msra.mxu0 0.0
        %1458 = vmatprep.subr.mxu0 0.0
        %1459 = vmatpush1.msra.mxu0 0.0
        %1460 = vmatprep.subr.mxu0 0.0
        %1461 = vmatpush1.msra.mxu0 0.0
        %1462 = vmatprep.subr.mxu0 0.0
        %1463 = vmatpush1.msra.mxu0 0.0
        %1464 = vmatprep.subr.mxu0 0.0
        %1465 = vmatpush1.msra.mxu0 0.0
        %1466 = vmatprep.subr.mxu0 0.0
        %1467 = vmatpush1.msra.mxu0 0.0
        %1468 = vmatprep.subr.mxu0 0.0
        %1469 = vmatpush1.msra.mxu0 0.0
        %1470 = vmatprep.subr.mxu0 0.0
        %1471 = vmatpush1.msra.mxu0 0.0
        %1472 = vmatprep.subr.mxu0 0.0
        %1473 = vmatpush1.msra.mxu0 0.0
        %1474 = vmatprep.subr.mxu0 0.0
        %1475 = vmatpush1.msra.mxu0 0.0
        %1476 = vmatprep.subr.mxu0 0.0
        %1477 = vmatpush1.msra.mxu0 0.0
        %1478 = vmatprep.mubr.f32.mxu0 0.0
        %1479 = vmatmul.mubr.f32.gmra.mrb[0].mxu0 %v618
        %v1480 = vpop.f32.mrb[0].mxu0
        %v1481 = vadd.f32 0.0, %v1480
        %v1482 = vpop.f32.mrb[0].mxu0
        %1483 = vmatprep.mubr.f32.mxu0 0.0
        %1484 = vmatmul.mubr.f32.gmra.mrb[0].mxu0 %v620
        %v1485 = vpop.f32.mrb[0].mxu0
        %v1486 = vadd.f32 0.0, %v1485
        %v1487 = vpop.f32.mrb[0].mxu0
        %1488 = vmatprep.mubr.f32.mxu0 0.0
        %1489 = vmatmul.mubr.f32.gmra.mrb[0].mxu0 %v622
        %v1490 = vpop.f32.mrb[0].mxu0
        %v1491 = vadd.f32 0.0, %v1490
        %v1492 = vpop.f32.mrb[0].mxu0
        %1493 = vmatprep.mubr.f32.mxu0 0.0
        %1494 = vmatmul.mubr.f32.gmra.mrb[0].mxu0 %v624
        %v1495 = vpop.f32.mrb[0].mxu0
        %v1496 = vadd.f32 0.0, %v1495
        %v1497 = vpop.f32.mrb[0].mxu0
        %1498 = vmatprep.mubr.f32.mxu0 0.0
        %1499 = vmatmul.mubr.f32.gmra.mrb[0].mxu0 %v1016
        %v1500 = vpop.f32.mrb[0].mxu0
        %v1501 = vadd.f32 0.0, %v1500
        %v1502 = vpop.f32.mrb[0].mxu0
        %1503 = vmatprep.mubr.f32.mxu0 0.0
        %1504 = vmatmul.mubr.f32.gmra.mrb[0].mxu0 %v1018
        %v1505 = vpop.f32.mrb[0].mxu0
        %v1506 = vadd.f32 0.0, %v1505
        %v1507 = vpop.f32.mrb[0].mxu0
        %1508 = vmatprep.mubr.f32.mxu0 0.0
        %1509 = vmatmul.mubr.f32.gmra.mrb[0].mxu0 %v1410
        %v1510 = vpop.f32.mrb[0].mxu0
        %v1511 = vadd.f32 0.0, %v1510
        %v1512 = vpop.f32.mrb[0].mxu0
        %1513 = vmatprep.mubr.f32.mxu0 0.0
        %1514 = vmatmul.mubr.f32.gmra.mrb[0].mxu0 %v1412
        %v1515 = vpop.f32.mrb[0].mxu0
        %v1516 = vadd.f32 0.0, %v1515
        %v1517 = vpop.f32.mrb[0].mxu0
        %1518 = vdwg.mxu0
        %v1519 = vadd.f32 %v1387, %v1481
        %v1520 = vadd.f32 %v1388, %v1486
        %v1521 = vadd.f32 %v1389, %v1491
        %v1522 = vadd.f32 %v1390, %v1496
        %v1523 = vadd.f32 %v1391, %v1501
        %v1524 = vadd.f32 %v1392, %v1506
        %v1525 = vadd.f32 %v1393, %v1511
        %v1526 = vadd.f32 %v1394, %v1516
        %v1527 = vld [vmem:[%s2] sm:$0x1]
        %v1529 = vlaneseq
        %v1530 = vshrl.u32 %v1529, 7
        %v1531 = vsub.s32 0, %v1530
        %v1532 = vrot.slane %v1527, %v1531
        %v1534 = vadd.f32 %v1519, %v1532
        %v1535 = vadd.f32 %v1520, %v1532
        %v1536 = vadd.f32 %v1521, %v1532
        %v1537 = vadd.f32 %v1522, %v1532
        %v1538 = vadd.f32 %v1523, %v1532
        %v1539 = vadd.f32 %v1524, %v1532
        %v1540 = vadd.f32 %v1525, %v1532
        %v1541 = vadd.f32 %v1526, %v1532
        %1542 = vxpose.xlu0.b32.start [1/16] %v1534, 128
        %1543 = vxpose.xlu0.b32.cont [2/16] %v1535, 128
        %1544 = vxpose.xlu0.b32.cont [3/16] %v1536, 128
        %1545 = vxpose.xlu0.b32.cont [4/16] %v1537, 128
        %1546 = vxpose.xlu0.b32.cont [5/16] %v1538, 128
        %1547 = vxpose.xlu0.b32.cont [6/16] %v1539, 128
        %1548 = vxpose.xlu0.b32.cont [7/16] %v1540, 128
        %1549 = vxpose.xlu0.b32.cont [8/16] %v1541, 128
        %1550 = vxpose.xlu0.b32.cont [9/16] 0.0, 128
        %1551 = vxpose.xlu0.b32.cont [10/16] 0.0, 128
        %1552 = vxpose.xlu0.b32.cont [11/16] 0.0, 128
        %1553 = vxpose.xlu0.b32.cont [12/16] 0.0, 128
        %1554 = vxpose.xlu0.b32.cont [13/16] 0.0, 128
        %1555 = vxpose.xlu0.b32.cont [14/16] 0.0, 128
        %1556 = vxpose.xlu0.b32.cont [15/16] 0.0, 128
        %1557 = vxpose.xlu0.b32.end [16/16] 0.0, 128
        %v1558 = vpop.trf.xlu0
        %v1559 = vpop.trf.xlu0
        %v1560 = vpop.trf.xlu0
        %v1561 = vpop.trf.xlu0
        %v1562 = vpop.trf.xlu0
        %v1563 = vpop.trf.xlu0
        %v1564 = vpop.trf.xlu0
        %v1565 = vpop.trf.xlu0
        %v1566 = vpop.trf.xlu0
        %v1567 = vpop.trf.xlu0
        %v1568 = vpop.trf.xlu0
        %v1569 = vpop.trf.xlu0
        %v1570 = vpop.trf.xlu0
        %v1571 = vpop.trf.xlu0
        %v1572 = vpop.trf.xlu0
        %v1573 = vpop.trf.xlu0
        %v1574 = vcombine.high %v1558, 0.0
        %v1576 = vunpack.c.l.s4 1983009808
        %v1577 = vunpack.c.0.s8 %v1576
        %v1578 = vlaneseq
        %v1579 = vshrl.u32 %v1578, 7
        %v1580 = vsub.s32 %v1577, %v1579
        %v1581 = vrot.slane %v1558, %v1580
        %v1583 = vunpack.c.l.s4 1983009808
        %v1584 = vunpack.c.0.s8 %v1583
        %v1585 = vlaneseq
        %v1586 = vshrl.u32 %v1585, 7
        %v1587 = vsub.s32 %v1584, %v1586
        %v1588 = vrot.slane %v1574, %v1587
        %v1589 = vcombine.high %v1581, 0.0
        %v1591 = vunpack.c.l.s4 1934713408
        %v1592 = vunpack.c.0.s8 %v1591
        %v1593 = vlaneseq
        %v1594 = vshrl.u32 %v1593, 7
        %v1595 = vsub.s32 %v1592, %v1594
        %v1596 = vrot.slane %v1581, %v1595
        %v1598 = vunpack.c.l.s4 1934713408
        %v1599 = vunpack.c.0.s8 %v1598
        %v1600 = vlaneseq
        %v1601 = vshrl.u32 %v1600, 7
        %v1602 = vsub.s32 %v1599, %v1601
        %v1603 = vrot.slane %v1589, %v1602
        %v1604 = vcombine.high %v1588, 0.0
        %v1606 = vunpack.c.l.s4 1934713408
        %v1607 = vunpack.c.0.s8 %v1606
        %v1608 = vlaneseq
        %v1609 = vshrl.u32 %v1608, 7
        %v1610 = vsub.s32 %v1607, %v1609
        %v1611 = vrot.slane %v1588, %v1610
        %v1613 = vunpack.c.l.s4 1934713408
        %v1614 = vunpack.c.0.s8 %v1613
        %v1615 = vlaneseq
        %v1616 = vshrl.u32 %v1615, 7
        %v1617 = vsub.s32 %v1614, %v1616
        %v1618 = vrot.slane %v1604, %v1617
        %v1619 = vcombine.high %v1596, 0.0
        %v1620 = vcombine.high %v1603, 0.0
        %v1621 = vcombine.high %v1611, 0.0
        %v1622 = vcombine.high %v1618, 0.0
        %v1623 = vcombine.high %v1559, 0.0
        %v1625 = vunpack.c.l.s4 1983009808
        %v1626 = vunpack.c.0.s8 %v1625
        %v1627 = vlaneseq
        %v1628 = vshrl.u32 %v1627, 7
        %v1629 = vsub.s32 %v1626, %v1628
        %v1630 = vrot.slane %v1559, %v1629
        %v1632 = vunpack.c.l.s4 1983009808
        %v1633 = vunpack.c.0.s8 %v1632
        %v1634 = vlaneseq
        %v1635 = vshrl.u32 %v1634, 7
        %v1636 = vsub.s32 %v1633, %v1635
        %v1637 = vrot.slane %v1623, %v1636
        %v1638 = vcombine.high %v1630, 0.0
        %v1640 = vunpack.c.l.s4 1934713408
        %v1641 = vunpack.c.0.s8 %v1640
        %v1642 = vlaneseq
        %v1643 = vshrl.u32 %v1642, 7
        %v1644 = vsub.s32 %v1641, %v1643
        %v1645 = vrot.slane %v1630, %v1644
        %v1647 = vunpack.c.l.s4 1934713408
        %v1648 = vunpack.c.0.s8 %v1647
        %v1649 = vlaneseq
        %v1650 = vshrl.u32 %v1649, 7
        %v1651 = vsub.s32 %v1648, %v1650
        %v1652 = vrot.slane %v1638, %v1651
        %v1653 = vcombine.high %v1637, 0.0
        %v1655 = vunpack.c.l.s4 1934713408
        %v1656 = vunpack.c.0.s8 %v1655
        %v1657 = vlaneseq
        %v1658 = vshrl.u32 %v1657, 7
        %v1659 = vsub.s32 %v1656, %v1658
        %v1660 = vrot.slane %v1637, %v1659
        %v1662 = vunpack.c.l.s4 1934713408
        %v1663 = vunpack.c.0.s8 %v1662
        %v1664 = vlaneseq
        %v1665 = vshrl.u32 %v1664, 7
        %v1666 = vsub.s32 %v1663, %v1665
        %v1667 = vrot.slane %v1653, %v1666
        %v1668 = vcombine.high %v1645, 0.0
        %v1669 = vcombine.high %v1652, 0.0
        %v1670 = vcombine.high %v1660, 0.0
        %v1671 = vcombine.high %v1667, 0.0
        %v1672 = vcombine.high %v1560, 0.0
        %v1674 = vunpack.c.l.s4 1983009808
        %v1675 = vunpack.c.0.s8 %v1674
        %v1676 = vlaneseq
        %v1677 = vshrl.u32 %v1676, 7
        %v1678 = vsub.s32 %v1675, %v1677
        %v1679 = vrot.slane %v1560, %v1678
        %v1681 = vunpack.c.l.s4 1983009808
        %v1682 = vunpack.c.0.s8 %v1681
        %v1683 = vlaneseq
        %v1684 = vshrl.u32 %v1683, 7
        %v1685 = vsub.s32 %v1682, %v1684
        %v1686 = vrot.slane %v1672, %v1685
        %v1687 = vcombine.high %v1679, 0.0
        %v1689 = vunpack.c.l.s4 1934713408
        %v1690 = vunpack.c.0.s8 %v1689
        %v1691 = vlaneseq
        %v1692 = vshrl.u32 %v1691, 7
        %v1693 = vsub.s32 %v1690, %v1692
        %v1694 = vrot.slane %v1679, %v1693
        %v1696 = vunpack.c.l.s4 1934713408
        %v1697 = vunpack.c.0.s8 %v1696
        %v1698 = vlaneseq
        %v1699 = vshrl.u32 %v1698, 7
        %v1700 = vsub.s32 %v1697, %v1699
        %v1701 = vrot.slane %v1687, %v1700
        %v1702 = vcombine.high %v1686, 0.0
        %v1704 = vunpack.c.l.s4 1934713408
        %v1705 = vunpack.c.0.s8 %v1704
        %v1706 = vlaneseq
        %v1707 = vshrl.u32 %v1706, 7
        %v1708 = vsub.s32 %v1705, %v1707
        %v1709 = vrot.slane %v1686, %v1708
        %v1711 = vunpack.c.l.s4 1934713408
        %v1712 = vunpack.c.0.s8 %v1711
        %v1713 = vlaneseq
        %v1714 = vshrl.u32 %v1713, 7
        %v1715 = vsub.s32 %v1712, %v1714
        %v1716 = vrot.slane %v1702, %v1715
        %v1717 = vcombine.high %v1694, 0.0
        %v1718 = vcombine.high %v1701, 0.0
        %v1719 = vcombine.high %v1709, 0.0
        %v1720 = vcombine.high %v1716, 0.0
        %v1721 = vcombine.high %v1561, 0.0
        %v1723 = vunpack.c.l.s4 1983009808
        %v1724 = vunpack.c.0.s8 %v1723
        %v1725 = vlaneseq
        %v1726 = vshrl.u32 %v1725, 7
        %v1727 = vsub.s32 %v1724, %v1726
        %v1728 = vrot.slane %v1561, %v1727
        %v1730 = vunpack.c.l.s4 1983009808
        %v1731 = vunpack.c.0.s8 %v1730
        %v1732 = vlaneseq
        %v1733 = vshrl.u32 %v1732, 7
        %v1734 = vsub.s32 %v1731, %v1733
        %v1735 = vrot.slane %v1721, %v1734
        %v1736 = vcombine.high %v1728, 0.0
        %v1738 = vunpack.c.l.s4 1934713408
        %v1739 = vunpack.c.0.s8 %v1738
        %v1740 = vlaneseq
        %v1741 = vshrl.u32 %v1740, 7
        %v1742 = vsub.s32 %v1739, %v1741
        %v1743 = vrot.slane %v1728, %v1742
        %v1745 = vunpack.c.l.s4 1934713408
        %v1746 = vunpack.c.0.s8 %v1745
        %v1747 = vlaneseq
        %v1748 = vshrl.u32 %v1747, 7
        %v1749 = vsub.s32 %v1746, %v1748
        %v1750 = vrot.slane %v1736, %v1749
        %v1751 = vcombine.high %v1735, 0.0
        %v1753 = vunpack.c.l.s4 1934713408
        %v1754 = vunpack.c.0.s8 %v1753
        %v1755 = vlaneseq
        %v1756 = vshrl.u32 %v1755, 7
        %v1757 = vsub.s32 %v1754, %v1756
        %v1758 = vrot.slane %v1735, %v1757
        %v1760 = vunpack.c.l.s4 1934713408
        %v1761 = vunpack.c.0.s8 %v1760
        %v1762 = vlaneseq
        %v1763 = vshrl.u32 %v1762, 7
        %v1764 = vsub.s32 %v1761, %v1763
        %v1765 = vrot.slane %v1751, %v1764
        %v1766 = vcombine.high %v1743, 0.0
        %v1767 = vcombine.high %v1750, 0.0
        %v1768 = vcombine.high %v1758, 0.0
        %v1769 = vcombine.high %v1765, 0.0
        %v1770 = vcombine.high %v1562, 0.0
        %v1772 = vunpack.c.l.s4 1983009808
        %v1773 = vunpack.c.0.s8 %v1772
        %v1774 = vlaneseq
        %v1775 = vshrl.u32 %v1774, 7
        %v1776 = vsub.s32 %v1773, %v1775
        %v1777 = vrot.slane %v1562, %v1776
        %v1779 = vunpack.c.l.s4 1983009808
        %v1780 = vunpack.c.0.s8 %v1779
        %v1781 = vlaneseq
        %v1782 = vshrl.u32 %v1781, 7
        %v1783 = vsub.s32 %v1780, %v1782
        %v1784 = vrot.slane %v1770, %v1783
        %v1785 = vcombine.high %v1777, 0.0
        %v1787 = vunpack.c.l.s4 1934713408
        %v1788 = vunpack.c.0.s8 %v1787
        %v1789 = vlaneseq
        %v1790 = vshrl.u32 %v1789, 7
        %v1791 = vsub.s32 %v1788, %v1790
        %v1792 = vrot.slane %v1777, %v1791
        %v1794 = vunpack.c.l.s4 1934713408
        %v1795 = vunpack.c.0.s8 %v1794
        %v1796 = vlaneseq
        %v1797 = vshrl.u32 %v1796, 7
        %v1798 = vsub.s32 %v1795, %v1797
        %v1799 = vrot.slane %v1785, %v1798
        %v1800 = vcombine.high %v1784, 0.0
        %v1802 = vunpack.c.l.s4 1934713408
        %v1803 = vunpack.c.0.s8 %v1802
        %v1804 = vlaneseq
        %v1805 = vshrl.u32 %v1804, 7
        %v1806 = vsub.s32 %v1803, %v1805
        %v1807 = vrot.slane %v1784, %v1806
        %v1809 = vunpack.c.l.s4 1934713408
        %v1810 = vunpack.c.0.s8 %v1809
        %v1811 = vlaneseq
        %v1812 = vshrl.u32 %v1811, 7
        %v1813 = vsub.s32 %v1810, %v1812
        %v1814 = vrot.slane %v1800, %v1813
        %v1815 = vcombine.high %v1792, 0.0
        %v1816 = vcombine.high %v1799, 0.0
        %v1817 = vcombine.high %v1807, 0.0
        %v1818 = vcombine.high %v1814, 0.0
        %v1819 = vcombine.high %v1563, 0.0
        %v1821 = vunpack.c.l.s4 1983009808
        %v1822 = vunpack.c.0.s8 %v1821
        %v1823 = vlaneseq
        %v1824 = vshrl.u32 %v1823, 7
        %v1825 = vsub.s32 %v1822, %v1824
        %v1826 = vrot.slane %v1563, %v1825
        %v1828 = vunpack.c.l.s4 1983009808
        %v1829 = vunpack.c.0.s8 %v1828
        %v1830 = vlaneseq
        %v1831 = vshrl.u32 %v1830, 7
        %v1832 = vsub.s32 %v1829, %v1831
        %v1833 = vrot.slane %v1819, %v1832
        %v1834 = vcombine.high %v1826, 0.0
        %v1836 = vunpack.c.l.s4 1934713408
        %v1837 = vunpack.c.0.s8 %v1836
        %v1838 = vlaneseq
        %v1839 = vshrl.u32 %v1838, 7
        %v1840 = vsub.s32 %v1837, %v1839
        %v1841 = vrot.slane %v1826, %v1840
        %v1843 = vunpack.c.l.s4 1934713408
        %v1844 = vunpack.c.0.s8 %v1843
        %v1845 = vlaneseq
        %v1846 = vshrl.u32 %v1845, 7
        %v1847 = vsub.s32 %v1844, %v1846
        %v1848 = vrot.slane %v1834, %v1847
        %v1849 = vcombine.high %v1833, 0.0
        %v1851 = vunpack.c.l.s4 1934713408
        %v1852 = vunpack.c.0.s8 %v1851
        %v1853 = vlaneseq
        %v1854 = vshrl.u32 %v1853, 7
        %v1855 = vsub.s32 %v1852, %v1854
        %v1856 = vrot.slane %v1833, %v1855
        %v1858 = vunpack.c.l.s4 1934713408
        %v1859 = vunpack.c.0.s8 %v1858
        %v1860 = vlaneseq
        %v1861 = vshrl.u32 %v1860, 7
        %v1862 = vsub.s32 %v1859, %v1861
        %v1863 = vrot.slane %v1849, %v1862
        %v1864 = vcombine.high %v1841, 0.0
        %v1865 = vcombine.high %v1848, 0.0
        %v1866 = vcombine.high %v1856, 0.0
        %v1867 = vcombine.high %v1863, 0.0
        %v1868 = vcombine.high %v1564, 0.0
        %v1870 = vunpack.c.l.s4 1983009808
        %v1871 = vunpack.c.0.s8 %v1870
        %v1872 = vlaneseq
        %v1873 = vshrl.u32 %v1872, 7
        %v1874 = vsub.s32 %v1871, %v1873
        %v1875 = vrot.slane %v1564, %v1874
        %v1877 = vunpack.c.l.s4 1983009808
        %v1878 = vunpack.c.0.s8 %v1877
        %v1879 = vlaneseq
        %v1880 = vshrl.u32 %v1879, 7
        %v1881 = vsub.s32 %v1878, %v1880
        %v1882 = vrot.slane %v1868, %v1881
        %v1883 = vcombine.high %v1875, 0.0
        %v1885 = vunpack.c.l.s4 1934713408
        %v1886 = vunpack.c.0.s8 %v1885
        %v1887 = vlaneseq
        %v1888 = vshrl.u32 %v1887, 7
        %v1889 = vsub.s32 %v1886, %v1888
        %v1890 = vrot.slane %v1875, %v1889
        %v1892 = vunpack.c.l.s4 1934713408
        %v1893 = vunpack.c.0.s8 %v1892
        %v1894 = vlaneseq
        %v1895 = vshrl.u32 %v1894, 7
        %v1896 = vsub.s32 %v1893, %v1895
        %v1897 = vrot.slane %v1883, %v1896
        %v1898 = vcombine.high %v1882, 0.0
        %v1900 = vunpack.c.l.s4 1934713408
        %v1901 = vunpack.c.0.s8 %v1900
        %v1902 = vlaneseq
        %v1903 = vshrl.u32 %v1902, 7
        %v1904 = vsub.s32 %v1901, %v1903
        %v1905 = vrot.slane %v1882, %v1904
        %v1907 = vunpack.c.l.s4 1934713408
        %v1908 = vunpack.c.0.s8 %v1907
        %v1909 = vlaneseq
        %v1910 = vshrl.u32 %v1909, 7
        %v1911 = vsub.s32 %v1908, %v1910
        %v1912 = vrot.slane %v1898, %v1911
        %v1913 = vcombine.high %v1890, 0.0
        %v1914 = vcombine.high %v1897, 0.0
        %v1915 = vcombine.high %v1905, 0.0
        %v1916 = vcombine.high %v1912, 0.0
        %v1917 = vcombine.high %v1565, 0.0
        %v1919 = vunpack.c.l.s4 1983009808
        %v1920 = vunpack.c.0.s8 %v1919
        %v1921 = vlaneseq
        %v1922 = vshrl.u32 %v1921, 7
        %v1923 = vsub.s32 %v1920, %v1922
        %v1924 = vrot.slane %v1565, %v1923
        %v1926 = vunpack.c.l.s4 1983009808
        %v1927 = vunpack.c.0.s8 %v1926
        %v1928 = vlaneseq
        %v1929 = vshrl.u32 %v1928, 7
        %v1930 = vsub.s32 %v1927, %v1929
        %v1931 = vrot.slane %v1917, %v1930
        %v1932 = vcombine.high %v1924, 0.0
        %v1934 = vunpack.c.l.s4 1934713408
        %v1935 = vunpack.c.0.s8 %v1934
        %v1936 = vlaneseq
        %v1937 = vshrl.u32 %v1936, 7
        %v1938 = vsub.s32 %v1935, %v1937
        %v1939 = vrot.slane %v1924, %v1938
        %v1941 = vunpack.c.l.s4 1934713408
        %v1942 = vunpack.c.0.s8 %v1941
        %v1943 = vlaneseq
        %v1944 = vshrl.u32 %v1943, 7
        %v1945 = vsub.s32 %v1942, %v1944
        %v1946 = vrot.slane %v1932, %v1945
        %v1947 = vcombine.high %v1931, 0.0
        %v1949 = vunpack.c.l.s4 1934713408
        %v1950 = vunpack.c.0.s8 %v1949
        %v1951 = vlaneseq
        %v1952 = vshrl.u32 %v1951, 7
        %v1953 = vsub.s32 %v1950, %v1952
        %v1954 = vrot.slane %v1931, %v1953
        %v1956 = vunpack.c.l.s4 1934713408
        %v1957 = vunpack.c.0.s8 %v1956
        %v1958 = vlaneseq
        %v1959 = vshrl.u32 %v1958, 7
        %v1960 = vsub.s32 %v1957, %v1959
        %v1961 = vrot.slane %v1947, %v1960
        %v1962 = vcombine.high %v1939, 0.0
        %v1963 = vcombine.high %v1946, 0.0
        %v1964 = vcombine.high %v1954, 0.0
        %v1965 = vcombine.high %v1961, 0.0
        %1967 = vrot.lane.b32.xlu0 %v1619, 64
        %v1968 = vpop.permute.xlu0 %1967
        %1971 = vrot.lane.b32.xlu0 %v1620, 64
        %v1972 = vpop.permute.xlu0 %1971
        %1975 = vrot.lane.b32.xlu0 %v1621, 64
        %v1976 = vpop.permute.xlu0 %1975
        %1979 = vrot.lane.b32.xlu0 %v1622, 64
        %v1980 = vpop.permute.xlu0 %1979
        %1983 = vrot.lane.b32.xlu0 %v1668, 64
        %v1984 = vpop.permute.xlu0 %1983
        %1987 = vrot.lane.b32.xlu0 %v1669, 64
        %v1988 = vpop.permute.xlu0 %1987
        %1991 = vrot.lane.b32.xlu0 %v1670, 64
        %v1992 = vpop.permute.xlu0 %1991
        %1995 = vrot.lane.b32.xlu0 %v1671, 64
        %v1996 = vpop.permute.xlu0 %1995
        %1999 = vrot.lane.b32.xlu0 %v1717, 64
        %v2000 = vpop.permute.xlu0 %1999
        %2003 = vrot.lane.b32.xlu0 %v1718, 64
        %v2004 = vpop.permute.xlu0 %2003
        %2007 = vrot.lane.b32.xlu0 %v1719, 64
        %v2008 = vpop.permute.xlu0 %2007
        %2011 = vrot.lane.b32.xlu0 %v1720, 64
        %v2012 = vpop.permute.xlu0 %2011
        %2015 = vrot.lane.b32.xlu0 %v1766, 64
        %v2016 = vpop.permute.xlu0 %2015
        %2019 = vrot.lane.b32.xlu0 %v1767, 64
        %v2020 = vpop.permute.xlu0 %2019
        %2023 = vrot.lane.b32.xlu0 %v1768, 64
        %v2024 = vpop.permute.xlu0 %2023
        %2027 = vrot.lane.b32.xlu0 %v1769, 64
        %v2028 = vpop.permute.xlu0 %2027
        %2031 = vrot.lane.b32.xlu0 %v1815, 64
        %v2032 = vpop.permute.xlu0 %2031
        %2035 = vrot.lane.b32.xlu0 %v1816, 64
        %v2036 = vpop.permute.xlu0 %2035
        %2039 = vrot.lane.b32.xlu0 %v1817, 64
        %v2040 = vpop.permute.xlu0 %2039
        %2043 = vrot.lane.b32.xlu0 %v1818, 64
        %v2044 = vpop.permute.xlu0 %2043
        %2047 = vrot.lane.b32.xlu0 %v1864, 64
        %v2048 = vpop.permute.xlu0 %2047
        %2051 = vrot.lane.b32.xlu0 %v1865, 64
        %v2052 = vpop.permute.xlu0 %2051
        %2055 = vrot.lane.b32.xlu0 %v1866, 64
        %v2056 = vpop.permute.xlu0 %2055
        %2059 = vrot.lane.b32.xlu0 %v1867, 64
        %v2060 = vpop.permute.xlu0 %2059
        %2063 = vrot.lane.b32.xlu0 %v1913, 64
        %v2064 = vpop.permute.xlu0 %2063
        %2067 = vrot.lane.b32.xlu0 %v1914, 64
        %v2068 = vpop.permute.xlu0 %2067
        %2071 = vrot.lane.b32.xlu0 %v1915, 64
        %v2072 = vpop.permute.xlu0 %2071
        %2075 = vrot.lane.b32.xlu0 %v1916, 64
        %v2076 = vpop.permute.xlu0 %2075
        %2079 = vrot.lane.b32.xlu0 %v1962, 64
        %v2080 = vpop.permute.xlu0 %2079
        %2083 = vrot.lane.b32.xlu0 %v1963, 64
        %v2084 = vpop.permute.xlu0 %2083
        %2087 = vrot.lane.b32.xlu0 %v1964, 64
        %v2088 = vpop.permute.xlu0 %2087
        %2091 = vrot.lane.b32.xlu0 %v1965, 64
        %v2092 = vpop.permute.xlu0 %2091
        %v2094 = vsel %vm184, %v1596, %v1968
        %v2095 = vsel %vm184, %v1603, %v1972
        %v2096 = vsel %vm184, %v1611, %v1976
        %v2097 = vsel %vm184, %v1618, %v1980
        %v2098 = vsel %vm184, %v1645, %v1984
        %v2099 = vsel %vm184, %v1652, %v1988
        %v2100 = vsel %vm184, %v1660, %v1992
        %v2101 = vsel %vm184, %v1667, %v1996
        %v2102 = vsel %vm184, %v1694, %v2000
        %v2103 = vsel %vm184, %v1701, %v2004
        %v2104 = vsel %vm184, %v1709, %v2008
        %v2105 = vsel %vm184, %v1716, %v2012
        %v2106 = vsel %vm184, %v1743, %v2016
        %v2107 = vsel %vm184, %v1750, %v2020
        %v2108 = vsel %vm184, %v1758, %v2024
        %v2109 = vsel %vm184, %v1765, %v2028
        %v2110 = vsel %vm184, %v1792, %v2032
        %v2111 = vsel %vm184, %v1799, %v2036
        %v2112 = vsel %vm184, %v1807, %v2040
        %v2113 = vsel %vm184, %v1814, %v2044
        %v2114 = vsel %vm184, %v1841, %v2048
        %v2115 = vsel %vm184, %v1848, %v2052
        %v2116 = vsel %vm184, %v1856, %v2056
        %v2117 = vsel %vm184, %v1863, %v2060
        %v2118 = vsel %vm184, %v1890, %v2064
        %v2119 = vsel %vm184, %v1897, %v2068
        %v2120 = vsel %vm184, %v1905, %v2072
        %v2121 = vsel %vm184, %v1912, %v2076
        %v2122 = vsel %vm184, %v1939, %v2080
        %v2123 = vsel %vm184, %v1946, %v2084
        %v2124 = vsel %vm184, %v1954, %v2088
        %v2125 = vsel %vm184, %v1961, %v2092
        %v2158 = vcombine.low %v2094, %v2095
        %v2159 = vcombine.low %v2096, %v2097
        %v2160 = vcombine.low %v2098, %v2099
        %v2161 = vcombine.low %v2100, %v2101
        %v2163 = vunpack.c.l.s4 1966171168
        %v2164 = vunpack.c.0.s8 %v2163
        %v2165 = vlaneseq
        %v2166 = vshrl.u32 %v2165, 7
        %v2167 = vsub.s32 %v2164, %v2166
        %v2168 = vrot.slane %v2158, %v2167
        %v2170 = vunpack.c.l.s4 1966171168
        %v2171 = vunpack.c.0.s8 %v2170
        %v2172 = vlaneseq
        %v2173 = vshrl.u32 %v2172, 7
        %v2174 = vsub.s32 %v2171, %v2173
        %v2175 = vrot.slane %v2159, %v2174
        %v2177 = vunpack.c.l.s4 1966171168
        %v2178 = vunpack.c.0.s8 %v2177
        %v2179 = vlaneseq
        %v2180 = vshrl.u32 %v2179, 7
        %v2181 = vsub.s32 %v2178, %v2180
        %v2182 = vrot.slane %v2160, %v2181
        %v2184 = vunpack.c.l.s4 1966171168
        %v2185 = vunpack.c.0.s8 %v2184
        %v2186 = vlaneseq
        %v2187 = vshrl.u32 %v2186, 7
        %v2188 = vsub.s32 %v2185, %v2187
        %v2189 = vrot.slane %v2161, %v2188
        %v2190 = vcombine.low %v2168, %v2175
        %v2191 = vcombine.low %v2182, %v2189
        %v2193 = vunpack.c.l.s4 1966171168
        %v2194 = vunpack.c.0.s8 %v2193
        %v2195 = vlaneseq
        %v2196 = vshrl.u32 %v2195, 7
        %v2197 = vsub.s32 %v2194, %v2196
        %v2198 = vrot.slane %v2190, %v2197
        %v2200 = vunpack.c.l.s4 1966171168
        %v2201 = vunpack.c.0.s8 %v2200
        %v2202 = vlaneseq
        %v2203 = vshrl.u32 %v2202, 7
        %v2204 = vsub.s32 %v2201, %v2203
        %v2205 = vrot.slane %v2191, %v2204
        %v2206 = vcombine.low %v2198, %v2205
        %v2207 = vcombine.low %v2102, %v2103
        %v2208 = vcombine.low %v2104, %v2105
        %v2209 = vcombine.low %v2106, %v2107
        %v2210 = vcombine.low %v2108, %v2109
        %v2212 = vunpack.c.l.s4 1966171168
        %v2213 = vunpack.c.0.s8 %v2212
        %v2214 = vlaneseq
        %v2215 = vshrl.u32 %v2214, 7
        %v2216 = vsub.s32 %v2213, %v2215
        %v2217 = vrot.slane %v2207, %v2216
        %v2219 = vunpack.c.l.s4 1966171168
        %v2220 = vunpack.c.0.s8 %v2219
        %v2221 = vlaneseq
        %v2222 = vshrl.u32 %v2221, 7
        %v2223 = vsub.s32 %v2220, %v2222
        %v2224 = vrot.slane %v2208, %v2223
        %v2226 = vunpack.c.l.s4 1966171168
        %v2227 = vunpack.c.0.s8 %v2226
        %v2228 = vlaneseq
        %v2229 = vshrl.u32 %v2228, 7
        %v2230 = vsub.s32 %v2227, %v2229
        %v2231 = vrot.slane %v2209, %v2230
        %v2233 = vunpack.c.l.s4 1966171168
        %v2234 = vunpack.c.0.s8 %v2233
        %v2235 = vlaneseq
        %v2236 = vshrl.u32 %v2235, 7
        %v2237 = vsub.s32 %v2234, %v2236
        %v2238 = vrot.slane %v2210, %v2237
        %v2239 = vcombine.low %v2217, %v2224
        %v2240 = vcombine.low %v2231, %v2238
        %v2242 = vunpack.c.l.s4 1966171168
        %v2243 = vunpack.c.0.s8 %v2242
        %v2244 = vlaneseq
        %v2245 = vshrl.u32 %v2244, 7
        %v2246 = vsub.s32 %v2243, %v2245
        %v2247 = vrot.slane %v2239, %v2246
        %v2249 = vunpack.c.l.s4 1966171168
        %v2250 = vunpack.c.0.s8 %v2249
        %v2251 = vlaneseq
        %v2252 = vshrl.u32 %v2251, 7
        %v2253 = vsub.s32 %v2250, %v2252
        %v2254 = vrot.slane %v2240, %v2253
        %v2255 = vcombine.low %v2247, %v2254
        %v2256 = vcombine.low %v2110, %v2111
        %v2257 = vcombine.low %v2112, %v2113
        %v2258 = vcombine.low %v2114, %v2115
        %v2259 = vcombine.low %v2116, %v2117
        %v2261 = vunpack.c.l.s4 1966171168
        %v2262 = vunpack.c.0.s8 %v2261
        %v2263 = vlaneseq
        %v2264 = vshrl.u32 %v2263, 7
        %v2265 = vsub.s32 %v2262, %v2264
        %v2266 = vrot.slane %v2256, %v2265
        %v2268 = vunpack.c.l.s4 1966171168
        %v2269 = vunpack.c.0.s8 %v2268
        %v2270 = vlaneseq
        %v2271 = vshrl.u32 %v2270, 7
        %v2272 = vsub.s32 %v2269, %v2271
        %v2273 = vrot.slane %v2257, %v2272
        %v2275 = vunpack.c.l.s4 1966171168
        %v2276 = vunpack.c.0.s8 %v2275
        %v2277 = vlaneseq
        %v2278 = vshrl.u32 %v2277, 7
        %v2279 = vsub.s32 %v2276, %v2278
        %v2280 = vrot.slane %v2258, %v2279
        %v2282 = vunpack.c.l.s4 1966171168
        %v2283 = vunpack.c.0.s8 %v2282
        %v2284 = vlaneseq
        %v2285 = vshrl.u32 %v2284, 7
        %v2286 = vsub.s32 %v2283, %v2285
        %v2287 = vrot.slane %v2259, %v2286
        %v2288 = vcombine.low %v2266, %v2273
        %v2289 = vcombine.low %v2280, %v2287
        %v2291 = vunpack.c.l.s4 1966171168
        %v2292 = vunpack.c.0.s8 %v2291
        %v2293 = vlaneseq
        %v2294 = vshrl.u32 %v2293, 7
        %v2295 = vsub.s32 %v2292, %v2294
        %v2296 = vrot.slane %v2288, %v2295
        %v2298 = vunpack.c.l.s4 1966171168
        %v2299 = vunpack.c.0.s8 %v2298
        %v2300 = vlaneseq
        %v2301 = vshrl.u32 %v2300, 7
        %v2302 = vsub.s32 %v2299, %v2301
        %v2303 = vrot.slane %v2289, %v2302
        %v2304 = vcombine.low %v2296, %v2303
        %v2305 = vcombine.low %v2118, %v2119
        %v2306 = vcombine.low %v2120, %v2121
        %v2307 = vcombine.low %v2122, %v2123
        %v2308 = vcombine.low %v2124, %v2125
        %v2310 = vunpack.c.l.s4 1966171168
        %v2311 = vunpack.c.0.s8 %v2310
        %v2312 = vlaneseq
        %v2313 = vshrl.u32 %v2312, 7
        %v2314 = vsub.s32 %v2311, %v2313
        %v2315 = vrot.slane %v2305, %v2314
        %v2317 = vunpack.c.l.s4 1966171168
        %v2318 = vunpack.c.0.s8 %v2317
        %v2319 = vlaneseq
        %v2320 = vshrl.u32 %v2319, 7
        %v2321 = vsub.s32 %v2318, %v2320
        %v2322 = vrot.slane %v2306, %v2321
        %v2324 = vunpack.c.l.s4 1966171168
        %v2325 = vunpack.c.0.s8 %v2324
        %v2326 = vlaneseq
        %v2327 = vshrl.u32 %v2326, 7
        %v2328 = vsub.s32 %v2325, %v2327
        %v2329 = vrot.slane %v2307, %v2328
        %v2331 = vunpack.c.l.s4 1966171168
        %v2332 = vunpack.c.0.s8 %v2331
        %v2333 = vlaneseq
        %v2334 = vshrl.u32 %v2333, 7
        %v2335 = vsub.s32 %v2332, %v2334
        %v2336 = vrot.slane %v2308, %v2335
        %v2337 = vcombine.low %v2315, %v2322
        %v2338 = vcombine.low %v2329, %v2336
        %v2340 = vunpack.c.l.s4 1966171168
        %v2341 = vunpack.c.0.s8 %v2340
        %v2342 = vlaneseq
        %v2343 = vshrl.u32 %v2342, 7
        %v2344 = vsub.s32 %v2341, %v2343
        %v2345 = vrot.slane %v2337, %v2344
        %v2347 = vunpack.c.l.s4 1966171168
        %v2348 = vunpack.c.0.s8 %v2347
        %v2349 = vlaneseq
        %v2350 = vshrl.u32 %v2349, 7
        %v2351 = vsub.s32 %v2348, %v2350
        %v2352 = vrot.slane %v2338, %v2351
        %v2353 = vcombine.low %v2345, %v2352
        %2358 = vst [vmem:[%s178] sm:$0xff] %v2206
        %2359 = vst [vmem:[%s178 + $0x8] sm:$0xff] %v2255
        %2360 = vst [vmem:[%s178 + $0x10] sm:$0xff] %v2304
        %2361 = vst [vmem:[%s178 + $0x18] sm:$0xff] %v2353
        %s2362 = sand.u32 %s94, 1
        %s2363 = scalar_lea.sflag [#allocation5], %s2362
        %s2364 = sand.u32 %s94, 1
        %s2365 = smul.addr %s2364, 32
        %s2366 = scalar_lea.vmem [#allocation6], %s2365
        // Predicated region
        $region37: #{tpu_custom_call.1} parent=31 // pred_check
          %p2367 = pneg %p104
        $region38: #{tpu_custom_call.1} parent=31 // pred_check_branch
          %2369 = sbr.rel (%p2367) target = $region40
        $region39: #{tpu_custom_call.1} parent=31 // pred_region
          %s2371 = ssub.s32 512, 512
          %2372 = vsyncadd %s2363, %s2371
          %s2373 = smul.addr %s18, 32
          %s2374 = smul.addr %s2373, 16
          %s2375 = scalar_lea.hbm %s3, %s2374
          %s2377 = sshll.u32 %s2366, 4
          %s2378 = int_to_ptr.vmem [resolvable:$true] %s2377
          %2380 = dma.vmem_to_hbm [thread:$0]  %s2378, 512, %s2375, %s2363
        $region40: #{tpu_custom_call.1} parent=31 // pred_fallthru
          _
      $region32: #{tpu_custom_call.1} parent=5 // pred_fallthru
        _
      %p2381 = scmp.le.s32.totalorder 2, %s13
      // Predicated region
      $region41: #{tpu_custom_call.1} parent=5 // pred_check
        %p2382 = pneg %p2381
      $region42: #{tpu_custom_call.1} parent=5 // pred_check_branch
        %2384 = sbr.rel (%p2382) target = $region44
      $region43: #{tpu_custom_call.1} parent=5 // pred_region
        %s2385 = ssub.s32 %s13, 2
        // Predicated region
        $region45: #{tpu_custom_call.1} parent=43 // pred_check
          %p2386 = pneg %p110
        $region46: #{tpu_custom_call.1} parent=43 // pred_check_branch
          %2388 = sbr.rel (%p2386) target = $region48
        $region47: #{tpu_custom_call.1} parent=43 // pred_region
          %s2389 = sand.u32 %s95, 1
          %s2390 = scalar_lea.sflag [#allocation5], %s2389
          %s2391 = sand.u32 %s95, 1
          %s2392 = smul.addr %s2391, 32
          %s2393 = scalar_lea.vmem [#allocation6], %s2392
          %2394 = dma.done %s2390, 512
        $region48: #{tpu_custom_call.1} parent=43 // pred_fallthru
          _
      $region44: #{tpu_custom_call.1} parent=5 // pred_fallthru
        _
    $region6: #{tpu_custom_call.1} parent=1 // loop_footer
      %s17 = sadd.s32 1, %s13
    $region7: #{tpu_custom_call.1} parent=1 // loop_footer_branch
      %12 = sbr.rel target = $region3
    $region8: #{tpu_custom_call.1} parent=1 // loop_exit
      _
    %2395 = vsyncpa [#allocation4], 1
    %s2396 = scalar_lea.sflag [#allocation4], 1
    %2397 = vsyncpa %s2396, 1
    %2398 = vsyncpa [#allocation5], 1
    %s2399 = scalar_lea.sflag [#allocation5], 1
    %2400 = vsyncpa %s2399, 1

</llo_original>
